<compile_context>
chip_gen: v6e
topology: v6e:2x2x1
jax: 0.10.0
libtpu: 0.0.40
codegen_flags: <defaults>
</compile_context>

<pallas_src>
import jax
import jax.numpy as jnp
from jax.experimental import pallas as pl
from jax.experimental.pallas import tpu as pltpu

# Logical (PyTorch) layer dims and lane-padded dims used by the kernel.
LAYER_DIMS = [784, 512, 256, 128, 64, 10]
PAD_DIMS = [896, 512, 256, 128, 128, 128]          # every dim multiple of 128

# Static, 128-aligned offsets of each (padded) bias inside the packed buffer.
_BIAS_OFFS = [0, 512, 768, 896, 1024, 1152]        # cumulative over PAD_DIMS[1:]
BIAS_TOTAL = _BIAS_OFFS[-1]                        # 1152

TM_MAX = 512                                       # batch-tile rows (fits v5e VMEM)


def mlp_kernel(x_ref, w1_ref, w2_ref, w3_ref, w4_ref, w5_ref, bias_ref, o_ref):
    """One batch tile: 5 MXU matmuls, bias+ReLU on the VPU in f32."""
    b = bias_ref  # (1, 1152) f32, static lane-aligned slices below

    h = jnp.dot(x_ref[...], w1_ref[...], preferred_element_type=jnp.float32)
    h = jnp.maximum(h + b[:, _BIAS_OFFS[0]:_BIAS_OFFS[1]], 0.0).astype(jnp.bfloat16)

    h = jnp.dot(h, w2_ref[...], preferred_element_type=jnp.float32)
    h = jnp.maximum(h + b[:, _BIAS_OFFS[1]:_BIAS_OFFS[2]], 0.0).astype(jnp.bfloat16)

    h = jnp.dot(h, w3_ref[...], preferred_element_type=jnp.float32)
    h = jnp.maximum(h + b[:, _BIAS_OFFS[2]:_BIAS_OFFS[3]], 0.0).astype(jnp.bfloat16)

    h = jnp.dot(h, w4_ref[...], preferred_element_type=jnp.float32)
    h = jnp.maximum(h + b[:, _BIAS_OFFS[3]:_BIAS_OFFS[4]], 0.0).astype(jnp.bfloat16)

    # final layer: logits (columns 10..127 are zero padding), no activation.
    # f32 accumulate, bf16 writeback (halves output HBM traffic).
    h = jnp.dot(h, w5_ref[...], preferred_element_type=jnp.float32)
    o_ref[...] = (h + b[:, _BIAS_OFFS[4]:_BIAS_OFFS[5]]).astype(o_ref.dtype)


def init_params(key):
    """PyTorch-shaped params with the default U(-1/sqrt(fan_in), ..) init."""
    params = []
    for i in range(len(LAYER_DIMS) - 1):
        fan_in, fan_out = LAYER_DIMS[i], LAYER_DIMS[i + 1]
        key, wk, bk = jax.random.split(key, 3)
        bound = 1.0 / (fan_in ** 0.5)
        w = jax.random.uniform(wk, (fan_in, fan_out), jnp.float32, -bound, bound)
        b = jax.random.uniform(bk, (fan_out,), jnp.float32, -bound, bound)
        params.append((w, b))
    return params


def prepare_params(params):
    """Zero-pad to lane-dense shapes, cast weights to bf16, pack biases."""
    ws = []
    bias_chunks = []
    for i, (w, b) in enumerate(params):
        in_p, out_p = PAD_DIMS[i], PAD_DIMS[i + 1]
        wp = jnp.zeros((in_p, out_p), jnp.float32).at[:w.shape[0], :w.shape[1]].set(w)
        bp = jnp.zeros((out_p,), jnp.float32).at[:b.shape[0]].set(b)
        ws.append(wp.astype(jnp.bfloat16))
        bias_chunks.append(bp)
    bias_packed = jnp.concatenate(bias_chunks).reshape(1, BIAS_TOTAL)  # (1,1152) f32
    return tuple(ws), bias_packed


def _round_up(x, m):
    return ((x + m - 1) // m) * m


def _choose_tm(n):
    """Batch tile: multiples of 16 rows, >=2 grid steps when possible (v7x
    megacore), balanced tiles to minimize batch padding, capped at TM_MAX."""
    n16 = _round_up(max(n, 1), 16)
    num_tiles = max(1, (n16 + TM_MAX - 1) // TM_MAX)
    if num_tiles == 1 and n16 > 16:
        num_tiles = 2                      # give v7x's second TensorCore a step
    tm = _round_up((n16 + num_tiles - 1) // num_tiles, 16)
    return min(tm, TM_MAX)


@jax.jit
def net_forward(x_nchw, ws, bias_packed):
    # x.view(-1, 784)
    x = x_nchw.reshape(-1, 784)
    n = x.shape[0]

    tm = _choose_tm(n)
    n_pad = _round_up(n, tm)
    grid = (n_pad // tm,)

    # Single fused pad+cast pass straight to bf16 (no f32 intermediate);
    # allow_input_fusion below lets XLA fold this producer into the
    # pallas_call's input stream instead of a separate HBM round trip.
    xp = jnp.pad(x.astype(jnp.bfloat16),
                 ((0, n_pad - n), (0, PAD_DIMS[0] - 784)))

    w1, w2, w3, w4, w5 = ws

    out = pl.pallas_call(
        mlp_kernel,
        out_shape=jax.ShapeDtypeStruct((n_pad, PAD_DIMS[-1]), jnp.bfloat16),
        grid=grid,
        in_specs=[
            # batch tile of activations, streamed/pipelined per grid step
            pl.BlockSpec((tm, PAD_DIMS[0]), lambda i: (i, 0)),
            # weights + packed bias: same block every step -> VMEM-resident
            pl.BlockSpec((PAD_DIMS[0], PAD_DIMS[1]), lambda i: (0, 0)),
            pl.BlockSpec((PAD_DIMS[1], PAD_DIMS[2]), lambda i: (0, 0)),
            pl.BlockSpec((PAD_DIMS[2], PAD_DIMS[3]), lambda i: (0, 0)),
            pl.BlockSpec((PAD_DIMS[3], PAD_DIMS[4]), lambda i: (0, 0)),
            pl.BlockSpec((PAD_DIMS[4], PAD_DIMS[5]), lambda i: (0, 0)),
            pl.BlockSpec((1, BIAS_TOTAL), lambda i: (0, 0)),
        ],
        out_specs=pl.BlockSpec((tm, PAD_DIMS[-1]), lambda i: (i, 0)),
        compiler_params=pltpu.CompilerParams(
            dimension_semantics=("parallel",),
            vmem_limit_bytes=32 * 1024 * 1024,   # clears v5e's 16 MiB default
            allow_input_fusion=[True, False, False, False, False, False, False],
        ),
    )(xp, w1, w2, w3, w4, w5, bias_packed)

    # strip batch padding + lane padding of the 10 logits; return f32 like torch
    return out[:n, :LAYER_DIMS[-1]].astype(jnp.float32)


def reference_forward(x_nchw, params):
    """Pure-JAX reference on the same bf16 weights / f32 accumulation path."""
    h = x_nchw.reshape(-1, 784).astype(jnp.float32)
    for i, (w, b) in enumerate(params):
        h = jnp.dot(h.astype(jnp.bfloat16), w.astype(jnp.bfloat16),
                    preferred_element_type=jnp.float32) + b.reshape(1, -1)
        if i < len(params) - 1:
            h = jnp.maximum(h, 0.0)
    return h


if __name__ == "__main__":
    key = jax.random.PRNGKey(0)
    pkey, xkey = jax.random.split(key)

    params = init_params(pkey)
    ws, bias_packed = prepare_params(params)

    # small batch of MNIST-like images: (N, C, H, W) = (8, 1, 28, 28)
    x = jax.random.normal(xkey, (8, 1, 28, 28), jnp.float32)

    logits = net_forward(x, ws, bias_packed)
    jax.block_until_ready(logits)

    assert logits.shape == (8, 10), logits.shape

    ref = reference_forward(x, params)
    assert jnp.allclose(logits, ref, atol=2e-2, rtol=2e-2), (
        "Pallas output does not match reference: max abs err = "
        f"{jnp.max(jnp.abs(logits - ref))}")

    print("KERNEL_OK")
</pallas_src>

<mosaic_0001>
module attributes {stable_mosaic.version = 11 : i64} {
  func.func @mlp_kernel(%arg0: i32, %arg1: memref<16x896xbf16, #tpu.memory_space<vmem>>, %arg2: memref<896x512xbf16, #tpu.memory_space<vmem>>, %arg3: memref<512x256xbf16, #tpu.memory_space<vmem>>, %arg4: memref<256x128xbf16, #tpu.memory_space<vmem>>, %arg5: memref<128x128xbf16, #tpu.memory_space<vmem>>, %arg6: memref<128x128xbf16, #tpu.memory_space<vmem>>, %arg7: memref<1x1152xf32, #tpu.memory_space<vmem>>, %arg8: memref<16x128xbf16, #tpu.memory_space<vmem>>) attributes {dimension_semantics = [#tpu.dimension_semantics<parallel>], iteration_bounds = array<i64: 1>, scalar_prefetch = 0 : i64, scratch_operands = 0 : i64, tpu.core_type = #tpu.core_type<tc>, window_params = [{transform_indices = @transform_0, window_bounds = array<i64: 16, 896>}, {pipeline_mode = #tpu.pipeline_mode<synchronous>, transform_indices = @transform_1, window_bounds = array<i64: 896, 512>}, {pipeline_mode = #tpu.pipeline_mode<synchronous>, transform_indices = @transform_2, window_bounds = array<i64: 512, 256>}, {pipeline_mode = #tpu.pipeline_mode<synchronous>, transform_indices = @transform_3, window_bounds = array<i64: 256, 128>}, {pipeline_mode = #tpu.pipeline_mode<synchronous>, transform_indices = @transform_4, window_bounds = array<i64: 128, 128>}, {pipeline_mode = #tpu.pipeline_mode<synchronous>, transform_indices = @transform_5, window_bounds = array<i64: 128, 128>}, {pipeline_mode = #tpu.pipeline_mode<synchronous>, transform_indices = @transform_6, window_bounds = array<i64: 1, 1152>}, {transform_indices = @transform_7, window_bounds = array<i64: 16, 128>}]} {
    %c0 = arith.constant 0 : index
    %c0_0 = arith.constant 0 : index
    %0 = vector.load %arg1[%c0, %c0_0] : memref<16x896xbf16, #tpu.memory_space<vmem>>, vector<16x896xbf16>
    %c0_1 = arith.constant 0 : index
    %c0_2 = arith.constant 0 : index
    %1 = vector.load %arg2[%c0_1, %c0_2] : memref<896x512xbf16, #tpu.memory_space<vmem>>, vector<896x512xbf16>
    %cst = arith.constant dense<0.000000e+00> : vector<16x512xf32>
    %2 = tpu.matmul %0, %1, %cst {dimension_numbers = #tpu.dot_dimension_numbers<[1], [0], [0], [1], [0, 0, 1, 1], [], []>} : vector<16x896xbf16>, vector<896x512xbf16>, vector<16x512xf32> -> vector<16x512xf32>
    %c0_3 = arith.constant 0 : index
    %c0_4 = arith.constant 0 : index
    %3 = vector.load %arg7[%c0_3, %c0_4] : memref<1x1152xf32, #tpu.memory_space<vmem>>, vector<1x512xf32>
    %4 = vector.broadcast %3 : vector<1x512xf32> to vector<16x512xf32>
    %5 = arith.addf %2, %4 : vector<16x512xf32>
    %cst_5 = arith.constant 0.000000e+00 : f32
    %6 = vector.broadcast %cst_5 : f32 to vector<16x512xf32>
    %7 = arith.maximumf %5, %6 : vector<16x512xf32>
    %8 = arith.truncf %7 : vector<16x512xf32> to vector<16x512xbf16>
    %c0_6 = arith.constant 0 : index
    %c0_7 = arith.constant 0 : index
    %9 = vector.load %arg3[%c0_6, %c0_7] : memref<512x256xbf16, #tpu.memory_space<vmem>>, vector<512x256xbf16>
    %cst_8 = arith.constant dense<0.000000e+00> : vector<16x256xf32>
    %10 = tpu.matmul %8, %9, %cst_8 {dimension_numbers = #tpu.dot_dimension_numbers<[1], [0], [0], [1], [0, 0, 1, 1], [], []>} : vector<16x512xbf16>, vector<512x256xbf16>, vector<16x256xf32> -> vector<16x256xf32>
    %c0_9 = arith.constant 0 : index
    %c512 = arith.constant 512 : index
    %11 = vector.load %arg7[%c0_9, %c512] : memref<1x1152xf32, #tpu.memory_space<vmem>>, vector<1x256xf32>
    %12 = vector.broadcast %11 : vector<1x256xf32> to vector<16x256xf32>
    %13 = arith.addf %10, %12 : vector<16x256xf32>
    %cst_10 = arith.constant 0.000000e+00 : f32
    %14 = vector.broadcast %cst_10 : f32 to vector<16x256xf32>
    %15 = arith.maximumf %13, %14 : vector<16x256xf32>
    %16 = arith.truncf %15 : vector<16x256xf32> to vector<16x256xbf16>
    %c0_11 = arith.constant 0 : index
    %c0_12 = arith.constant 0 : index
    %17 = vector.load %arg4[%c0_11, %c0_12] : memref<256x128xbf16, #tpu.memory_space<vmem>>, vector<256x128xbf16>
    %cst_13 = arith.constant dense<0.000000e+00> : vector<16x128xf32>
    %18 = tpu.matmul %16, %17, %cst_13 {dimension_numbers = #tpu.dot_dimension_numbers<[1], [0], [0], [1], [0, 0, 1, 1], [], []>} : vector<16x256xbf16>, vector<256x128xbf16>, vector<16x128xf32> -> vector<16x128xf32>
    %c0_14 = arith.constant 0 : index
    %c768 = arith.constant 768 : index
    %19 = vector.load %arg7[%c0_14, %c768] : memref<1x1152xf32, #tpu.memory_space<vmem>>, vector<1x128xf32>
    %20 = vector.broadcast %19 : vector<1x128xf32> to vector<16x128xf32>
    %21 = arith.addf %18, %20 : vector<16x128xf32>
    %cst_15 = arith.constant 0.000000e+00 : f32
    %22 = vector.broadcast %cst_15 : f32 to vector<16x128xf32>
    %23 = arith.maximumf %21, %22 : vector<16x128xf32>
    %24 = arith.truncf %23 : vector<16x128xf32> to vector<16x128xbf16>
    %c0_16 = arith.constant 0 : index
    %c0_17 = arith.constant 0 : index
    %25 = vector.load %arg5[%c0_16, %c0_17] : memref<128x128xbf16, #tpu.memory_space<vmem>>, vector<128x128xbf16>
    %cst_18 = arith.constant dense<0.000000e+00> : vector<16x128xf32>
    %26 = tpu.matmul %24, %25, %cst_18 {dimension_numbers = #tpu.dot_dimension_numbers<[1], [0], [0], [1], [0, 0, 1, 1], [], []>} : vector<16x128xbf16>, vector<128x128xbf16>, vector<16x128xf32> -> vector<16x128xf32>
    %c0_19 = arith.constant 0 : index
    %c896 = arith.constant 896 : index
    %27 = vector.load %arg7[%c0_19, %c896] : memref<1x1152xf32, #tpu.memory_space<vmem>>, vector<1x128xf32>
    %28 = vector.broadcast %27 : vector<1x128xf32> to vector<16x128xf32>
    %29 = arith.addf %26, %28 : vector<16x128xf32>
    %cst_20 = arith.constant 0.000000e+00 : f32
    %30 = vector.broadcast %cst_20 : f32 to vector<16x128xf32>
    %31 = arith.maximumf %29, %30 : vector<16x128xf32>
    %32 = arith.truncf %31 : vector<16x128xf32> to vector<16x128xbf16>
    %c0_21 = arith.constant 0 : index
    %c0_22 = arith.constant 0 : index
    %33 = vector.load %arg6[%c0_21, %c0_22] : memref<128x128xbf16, #tpu.memory_space<vmem>>, vector<128x128xbf16>
    %cst_23 = arith.constant dense<0.000000e+00> : vector<16x128xf32>
    %34 = tpu.matmul %32, %33, %cst_23 {dimension_numbers = #tpu.dot_dimension_numbers<[1], [0], [0], [1], [0, 0, 1, 1], [], []>} : vector<16x128xbf16>, vector<128x128xbf16>, vector<16x128xf32> -> vector<16x128xf32>
    %c0_24 = arith.constant 0 : index
    %c1024 = arith.constant 1024 : index
    %35 = vector.load %arg7[%c0_24, %c1024] : memref<1x1152xf32, #tpu.memory_space<vmem>>, vector<1x128xf32>
    %36 = vector.broadcast %35 : vector<1x128xf32> to vector<16x128xf32>
    %37 = arith.addf %34, %36 : vector<16x128xf32>
    %38 = arith.truncf %37 : vector<16x128xf32> to vector<16x128xbf16>
    %c0_25 = arith.constant 0 : index
    %c0_26 = arith.constant 0 : index
    %39 = vector.load %arg8[%c0_25, %c0_26] : memref<16x128xbf16, #tpu.memory_space<vmem>>, vector<16x128xbf16>
    tpu.vector_store %arg8[%c0_25, %c0_26], %38 {strides = array<i32>} : memref<16x128xbf16, #tpu.memory_space<vmem>>, vector<16x128xbf16>,
    return
  }
  func.func @transform_0(%arg0: i32) -> (i32, i32) {
    %c0_i32 = arith.constant 0 : i32
    %c0_i32_0 = arith.constant 0 : i32
    return %arg0, %c0_i32 : i32, i32
  }
  func.func @transform_1(%arg0: i32) -> (i32, i32) {
    %c0_i32 = arith.constant 0 : i32
    %c0_i32_0 = arith.constant 0 : i32
    %c0_i32_1 = arith.constant 0 : i32
    return %c0_i32, %c0_i32_0 : i32, i32
  }
  func.func @transform_2(%arg0: i32) -> (i32, i32) {
    %c0_i32 = arith.constant 0 : i32
    %c0_i32_0 = arith.constant 0 : i32
    %c0_i32_1 = arith.constant 0 : i32
    return %c0_i32, %c0_i32_0 : i32, i32
  }
  func.func @transform_3(%arg0: i32) -> (i32, i32) {
    %c0_i32 = arith.constant 0 : i32
    %c0_i32_0 = arith.constant 0 : i32
    %c0_i32_1 = arith.constant 0 : i32
    return %c0_i32, %c0_i32_0 : i32, i32
  }
  func.func @transform_4(%arg0: i32) -> (i32, i32) {
    %c0_i32 = arith.constant 0 : i32
    %c0_i32_0 = arith.constant 0 : i32
    %c0_i32_1 = arith.constant 0 : i32
    return %c0_i32, %c0_i32_0 : i32, i32
  }
  func.func @transform_5(%arg0: i32) -> (i32, i32) {
    %c0_i32 = arith.constant 0 : i32
    %c0_i32_0 = arith.constant 0 : i32
    %c0_i32_1 = arith.constant 0 : i32
    return %c0_i32, %c0_i32_0 : i32, i32
  }
  func.func @transform_6(%arg0: i32) -> (i32, i32) {
    %c0_i32 = arith.constant 0 : i32
    %c0_i32_0 = arith.constant 0 : i32
    %c0_i32_1 = arith.constant 0 : i32
    return %c0_i32, %c0_i32_0 : i32, i32
  }
  func.func @transform_7(%arg0: i32) -> (i32, i32) {
    %c0_i32 = arith.constant 0 : i32
    %c0_i32_0 = arith.constant 0 : i32
    return %arg0, %c0_i32 : i32, i32
  }
}

</mosaic_0001>

<llo_original>
// kernel: net_forward.2
$region0: #{net_forward.2}
  #allocation0 [shape = 'u32[]', space=smem, size = 0x4, offset = 0x4, fixed_abs, tag = 'smem constant byte address 0x4 - core index']
  #allocation1 [shape = 'u32[144,128]{1,0:T(1,128)}', space=vmem, size = 0x12000, scoped, tag = 'internal scratch']
  #allocation2 [shape = 'u32[2048]{0}', space=vmem, size = 0x2000, scoped, tag = 'scoped memory for net_forward.2']
  #allocation3 [shape = 'u32[2048]{0}', space=vmem, size = 0x2000, scoped, tag = 'scoped memory for net_forward.2']
  #allocation4 [shape = 'u32[2048]{0}', space=vmem, size = 0x2000, scoped, tag = 'scoped memory for net_forward.2']
  #allocation5 [shape = 'u32[2048]{0}', space=vmem, size = 0x2000, scoped, tag = 'scoped memory for net_forward.2']
  #allocation6 [shape = 'u32[2048]{0}', space=vmem, size = 0x2000, scoped, tag = 'scoped memory for net_forward.2']
  %s0 = inlined_call_operand.hbm [shape: bf16[896,512], index: 0, kind: input, shape index: {}]
  %s1 = inlined_call_operand.hbm [shape: bf16[512,256], index: 1, kind: input, shape index: {}]
  %s2 = inlined_call_operand.vmem [shape: bf16[256,128], index: 2, kind: input, shape index: {}]
  %s3 = inlined_call_operand.vmem [shape: bf16[128,128], index: 3, kind: input, shape index: {}]
  %s4 = inlined_call_operand.vmem [shape: bf16[128,128], index: 4, kind: input, shape index: {}]
  %s5 = inlined_call_operand.vmem [shape: f32[1,1152], index: 5, kind: input, shape index: {}]
  %s6 = inlined_call_operand.vmem [shape: bf16[8,784], index: 6, kind: input, shape index: {}]
  %s7 = inlined_call_operand.<no memory space> [shape: bf16[], index: 7, kind: input, shape index: {}]
  %s8 = inlined_call_operand.vmem [shape: bf16[16,128], index: 8, kind: output, shape index: {}]
  %s9 = sld [smem:[#allocation0]]
  $region46: #{net_forward.2} parent=0
    _
  %s11 = ssub.s32 1, %s9
  %s12 = scalar_select 0, %s11, %s9
  %v13 = vstv %s7
  %v14 = vunpack.i.l.bf16 %v13
  %v16 = vunpack.i.h.bf16 %v13
  $region1: #{net_forward.2} parent=0
    #allocation7 [shape = 'u8[917504]{0}', space=vmem, size = 0xe0000, scoped, tag = 'input window, operand 1, single buffered']
    #allocation8 [shape = 's32[1]{0}', space=sflag, size = 0x4, scoped, tag = 'scoped memory for net_forward.2']
    #allocation9 [shape = 'u8[262144]{0}', space=vmem, size = 0x40000, scoped, tag = 'input window, operand 2, single buffered']
    #allocation10 [shape = 's32[1]{0}', space=sflag, size = 0x4, scoped, tag = 'scoped memory for net_forward.2']
    #allocation11 [shape = 'u8[28672]{0}', space=vmem, size = 0x7000, dematerialized = true, scoped, tag = 'FusionAdapter Buffer %fusion.1 = bf16[16,896]{1,0:T(8,128)(2,1)} fusion(%param_6.1, %param_7), kind=kLoop, calls=%fused_computation.2.clone, metadata={op_name="jit(net_forward)/jit(_pad)/pad" stack_frame_id=9}']
    %18 = vsyncpa [#allocation8], 0
    %19 = vsyncpa [#allocation10], 0
    // Predicated region
    $region2: #{net_forward.2} parent=1 // pred_check
      _
    $region3: #{net_forward.2} parent=1 // pred_check_branch
      %21 = sbr.rel (0) target = $region5
    $region4: #{net_forward.2} parent=1 // pred_region
      _
    $region5: #{net_forward.2} parent=1 // pred_fallthru
      _
    // Predicated region
    $region6: #{net_forward.2} parent=1 // pred_check
      _
    $region7: #{net_forward.2} parent=1 // pred_check_branch
      %23 = sbr.rel (0) target = $region9
    $region8: #{net_forward.2} parent=1 // pred_region
      %s25 = ssub.s32 28672, 28672
      %26 = vsyncadd [#allocation8], %s25
      %s27 = sshll.u32 [#allocation7], 4
      %s28 = int_to_ptr.vmem [resolvable:$true] %s27
      %33 = dma.hbm_to_vmem [thread:$0]  %s0, 28672, %s28, [#allocation8], 256, 256, 16
    $region9: #{net_forward.2} parent=1 // pred_fallthru
      _
    // Predicated region
    $region10: #{net_forward.2} parent=1 // pred_check
      _
    $region11: #{net_forward.2} parent=1 // pred_check_branch
      %35 = sbr.rel (0) target = $region13
    $region12: #{net_forward.2} parent=1 // pred_region
      %s37 = ssub.s32 8192, 8192
      %38 = vsyncadd [#allocation10], %s37
      %s39 = sshll.u32 [#allocation9], 4
      %s40 = int_to_ptr.vmem [resolvable:$true] %s39
      %45 = dma.hbm_to_vmem [thread:$0]  %s1, 8192, %s40, [#allocation10], 128, 128, 8
    $region13: #{net_forward.2} parent=1 // pred_fallthru
      _
    // Predicated region
    $region14: #{net_forward.2} parent=1 // pred_check
      _
    $region15: #{net_forward.2} parent=1 // pred_check_branch
      %47 = sbr.rel (0) target = $region17
    $region16: #{net_forward.2} parent=1 // pred_region
      _
    $region17: #{net_forward.2} parent=1 // pred_fallthru
      _
    // Predicated region
    $region18: #{net_forward.2} parent=1 // pred_check
      _
    $region19: #{net_forward.2} parent=1 // pred_check_branch
      %49 = sbr.rel (0) target = $region21
    $region20: #{net_forward.2} parent=1 // pred_region
      _
    $region21: #{net_forward.2} parent=1 // pred_fallthru
      _
    // Predicated region
    $region22: #{net_forward.2} parent=1 // pred_check
      _
    $region23: #{net_forward.2} parent=1 // pred_check_branch
      %51 = sbr.rel (0) target = $region25
    $region24: #{net_forward.2} parent=1 // pred_region
      _
    $region25: #{net_forward.2} parent=1 // pred_fallthru
      _
    // Predicated region
    $region26: #{net_forward.2} parent=1 // pred_check
      _
    $region27: #{net_forward.2} parent=1 // pred_check_branch
      %53 = sbr.rel (0) target = $region29
    $region28: #{net_forward.2} parent=1 // pred_region
      _
    $region29: #{net_forward.2} parent=1 // pred_fallthru
      _
    // Predicated region
    $region30: #{net_forward.2} parent=1 // pred_check
      _
    $region31: #{net_forward.2} parent=1 // pred_check_branch
      %55 = sbr.rel (0) target = $region33
    $region32: #{net_forward.2} parent=1 // pred_region
      %56 = dma.done [#allocation8], 28672
    $region33: #{net_forward.2} parent=1 // pred_fallthru
      _
    // Predicated region
    $region34: #{net_forward.2} parent=1 // pred_check
      _
    $region35: #{net_forward.2} parent=1 // pred_check_branch
      %58 = sbr.rel (0) target = $region37
    $region36: #{net_forward.2} parent=1 // pred_region
      %59 = dma.done [#allocation10], 8192
    $region37: #{net_forward.2} parent=1 // pred_fallthru
      _
    %s61 = sor.u32 255, 127
    %s62 = sand.u32 %s61, 85
    %s63 = sshrl.u32 %s62, 1
    %s64 = sor.u32 %s62, %s63
    %s65 = sand.u32 51, %s64
    %s66 = sshrl.u32 %s65, 2
    %s67 = sor.u32 %s65, %s66
    %s68 = sand.u32 15, %s67
    %v69 = vld [vmem:[%s6] sm:%s68]
    %v70 = vunpack.c.l.bf16 %v69
    %v71 = vunpack.c.h.bf16 %v69
    %v72 = vlaneseq
    %v73 = vand.u32 %v72, 127
    %vm75 = vcmp.lt.s32.totalorder %v73, 784
    %v76 = vsel %vm75, %v70, %v14
    %v77 = vpack.c.bf16 0.0, %v76
    %s79 = ssub.s32 16, 1
    %80 = vst [vmem:[#allocation11] sm:%s79] %v77
    %s81 = scalar_lea.vmem %s6, 4
    %s83 = sor.u32 255, 127
    %s84 = sand.u32 %s83, 85
    %s85 = sshrl.u32 %s84, 1
    %s86 = sor.u32 %s84, %s85
    %s87 = sand.u32 51, %s86
    %s88 = sshrl.u32 %s87, 2
    %s89 = sor.u32 %s87, %s88
    %s90 = sand.u32 15, %s89
    %v91 = vld [vmem:[%s81] sm:%s90]
    %v92 = vunpack.c.l.bf16 %v91
    %v93 = vunpack.c.h.bf16 %v91
    %v94 = vlaneseq
    %v95 = vand.u32 %v94, 127
    %v96 = vadd.s32 %v95, 128
    %vm97 = vcmp.lt.s32.totalorder %v96, 784
    %v98 = vsel %vm97, %v92, %v14
    %s99 = scalar_lea.vmem [#allocation11], 4
    %v100 = vpack.c.bf16 0.0, %v98
    %s102 = ssub.s32 16, 1
    %103 = vst [vmem:[%s99] sm:%s102] %v100
    %s104 = scalar_lea.vmem %s6, 8
    %s106 = sor.u32 255, 127
    %s107 = sand.u32 %s106, 85
    %s108 = sshrl.u32 %s107, 1
    %s109 = sor.u32 %s107, %s108
    %s110 = sand.u32 51, %s109
    %s111 = sshrl.u32 %s110, 2
    %s112 = sor.u32 %s110, %s111
    %s113 = sand.u32 15, %s112
    %v114 = vld [vmem:[%s104] sm:%s113]
    %v115 = vunpack.c.l.bf16 %v114
    %v116 = vunpack.c.h.bf16 %v114
    %v117 = vlaneseq
    %v118 = vand.u32 %v117, 127
    %v119 = vadd.s32 %v118, 256
    %vm120 = vcmp.lt.s32.totalorder %v119, 784
    %v121 = vsel %vm120, %v115, %v14
    %s122 = scalar_lea.vmem [#allocation11], 8
    %v123 = vpack.c.bf16 0.0, %v121
    %s125 = ssub.s32 16, 1
    %126 = vst [vmem:[%s122] sm:%s125] %v123
    %s127 = scalar_lea.vmem %s6, 12
    %s129 = sor.u32 255, 127
    %s130 = sand.u32 %s129, 85
    %s131 = sshrl.u32 %s130, 1
    %s132 = sor.u32 %s130, %s131
    %s133 = sand.u32 51, %s132
    %s134 = sshrl.u32 %s133, 2
    %s135 = sor.u32 %s133, %s134
    %s136 = sand.u32 15, %s135
    %v137 = vld [vmem:[%s127] sm:%s136]
    %v138 = vunpack.c.l.bf16 %v137
    %v139 = vunpack.c.h.bf16 %v137
    %v140 = vlaneseq
    %v141 = vand.u32 %v140, 127
    %v142 = vadd.s32 %v141, 384
    %vm143 = vcmp.lt.s32.totalorder %v142, 784
    %v144 = vsel %vm143, %v138, %v14
    %s145 = scalar_lea.vmem [#allocation11], 12
    %v146 = vpack.c.bf16 0.0, %v144
    %s148 = ssub.s32 16, 1
    %149 = vst [vmem:[%s145] sm:%s148] %v146
    %s150 = scalar_lea.vmem %s6, 16
    %s152 = sor.u32 255, 127
    %s153 = sand.u32 %s152, 85
    %s154 = sshrl.u32 %s153, 1
    %s155 = sor.u32 %s153, %s154
    %s156 = sand.u32 51, %s155
    %s157 = sshrl.u32 %s156, 2
    %s158 = sor.u32 %s156, %s157
    %s159 = sand.u32 15, %s158
    %v160 = vld [vmem:[%s150] sm:%s159]
    %v161 = vunpack.c.l.bf16 %v160
    %v162 = vunpack.c.h.bf16 %v160
    %v163 = vlaneseq
    %v164 = vand.u32 %v163, 127
    %v165 = vadd.s32 %v164, 512
    %vm166 = vcmp.lt.s32.totalorder %v165, 784
    %v167 = vsel %vm166, %v161, %v14
    %s168 = scalar_lea.vmem [#allocation11], 16
    %v169 = vpack.c.bf16 0.0, %v167
    %s171 = ssub.s32 16, 1
    %172 = vst [vmem:[%s168] sm:%s171] %v169
    %s173 = scalar_lea.vmem %s6, 20
    %s175 = sor.u32 255, 127
    %s176 = sand.u32 %s175, 85
    %s177 = sshrl.u32 %s176, 1
    %s178 = sor.u32 %s176, %s177
    %s179 = sand.u32 51, %s178
    %s180 = sshrl.u32 %s179, 2
    %s181 = sor.u32 %s179, %s180
    %s182 = sand.u32 15, %s181
    %v183 = vld [vmem:[%s173] sm:%s182]
    %v184 = vunpack.c.l.bf16 %v183
    %v185 = vunpack.c.h.bf16 %v183
    %v186 = vlaneseq
    %v187 = vand.u32 %v186, 127
    %v188 = vadd.s32 %v187, 640
    %vm189 = vcmp.lt.s32.totalorder %v188, 784
    %v190 = vsel %vm189, %v184, %v14
    %s191 = scalar_lea.vmem [#allocation11], 20
    %v192 = vpack.c.bf16 0.0, %v190
    %s194 = ssub.s32 16, 1
    %195 = vst [vmem:[%s191] sm:%s194] %v192
    %s196 = scalar_lea.vmem %s6, 24
    %s198 = sor.u32 255, 127
    %s199 = sand.u32 %s198, 85
    %s200 = sshrl.u32 %s199, 1
    %s201 = sor.u32 %s199, %s200
    %s202 = sand.u32 51, %s201
    %s203 = sshrl.u32 %s202, 2
    %s204 = sor.u32 %s202, %s203
    %s205 = sand.u32 15, %s204
    %v206 = vld [vmem:[%s196] sm:%s205]
    %v207 = vunpack.c.l.bf16 %v206
    %v208 = vunpack.c.h.bf16 %v206
    %v209 = vlaneseq
    %v210 = vand.u32 %v209, 127
    %v211 = vadd.s32 %v210, 768
    %vm212 = vcmp.lt.s32.totalorder %v211, 784
    %v213 = vsel %vm212, %v207, %v14
    %s214 = scalar_lea.vmem [#allocation11], 24
    %v215 = vpack.c.bf16 0.0, %v213
    %s217 = ssub.s32 16, 1
    %218 = vst [vmem:[%s214] sm:%s217] %v215
    %s219 = scalar_lea.vmem [#allocation11], 28
    %v220 = vpack.c.bf16 0.0, %v14
    %s222 = ssub.s32 16, 1
    %223 = vst [vmem:[%s219] sm:%s222] %v220
    %s224 = scalar_lea.vmem [#allocation11], 32
    %v225 = vpack.c.bf16 0.0, %v14
    %s227 = ssub.s32 16, 1
    %228 = vst [vmem:[%s224] sm:%s227] %v225
    %s229 = scalar_lea.vmem [#allocation11], 36
    %v230 = vpack.c.bf16 0.0, %v14
    %s232 = ssub.s32 16, 1
    %233 = vst [vmem:[%s229] sm:%s232] %v230
    %s234 = scalar_lea.vmem [#allocation11], 40
    %v235 = vpack.c.bf16 0.0, %v14
    %s237 = ssub.s32 16, 1
    %238 = vst [vmem:[%s234] sm:%s237] %v235
    %s239 = scalar_lea.vmem [#allocation11], 44
    %v240 = vpack.c.bf16 0.0, %v14
    %s242 = ssub.s32 16, 1
    %243 = vst [vmem:[%s239] sm:%s242] %v240
    %s244 = scalar_lea.vmem [#allocation11], 48
    %v245 = vpack.c.bf16 0.0, %v14
    %s247 = ssub.s32 16, 1
    %248 = vst [vmem:[%s244] sm:%s247] %v245
    %s249 = scalar_lea.vmem [#allocation11], 52
    %v250 = vpack.c.bf16 0.0, %v14
    %s252 = ssub.s32 16, 1
    %253 = vst [vmem:[%s249] sm:%s252] %v250
    %v255 = vld [vmem:[#allocation11] sm:$0xff]
    %v256 = vld [vmem:[#allocation11 + $0x8] sm:$0xff]
    %v257 = vld [vmem:[#allocation11 + $0x10] sm:$0xff]
    %v258 = vld [vmem:[#allocation11 + $0x18] sm:$0xf]
    %v259 = vld [vmem:[#allocation11 + $0x1c] sm:$0xff]
    %v260 = vld [vmem:[#allocation11 + $0x24] sm:$0xff]
    %v261 = vld [vmem:[#allocation11 + $0x2c] sm:$0xff]
    %v262 = vld [vmem:[#allocation11 + $0x34] sm:$0xf]
    %v263 = vld [vmem:[#allocation7] sm:$0xff]
    %v264 = vld [vmem:[#allocation7 + $0x8] sm:$0xff]
    %v265 = vld [vmem:[#allocation7 + $0x10] sm:$0xff]
    %v266 = vld [vmem:[#allocation7 + $0x18] sm:$0xff]
    %v267 = vld [vmem:[#allocation7 + $0x20] sm:$0xff]
    %v268 = vld [vmem:[#allocation7 + $0x28] sm:$0xff]
    %v269 = vld [vmem:[#allocation7 + $0x30] sm:$0xff]
    %v270 = vld [vmem:[#allocation7 + $0x38] sm:$0xff]
    %v271 = vld [vmem:[#allocation7 + $0x40] sm:$0xff]
    %v272 = vld [vmem:[#allocation7 + $0x48] sm:$0xff]
    %v273 = vld [vmem:[#allocation7 + $0x50] sm:$0xff]
    %v274 = vld [vmem:[#allocation7 + $0x58] sm:$0xff]
    %v275 = vld [vmem:[#allocation7 + $0x60] sm:$0xff]
    %v276 = vld [vmem:[#allocation7 + $0x68] sm:$0xff]
    %v277 = vld [vmem:[#allocation7 + $0x70] sm:$0xff]
    %v278 = vld [vmem:[#allocation7 + $0x78] sm:$0xff]
    %v279 = vld [vmem:[#allocation7 + $0x80] sm:$0xff]
    %v280 = vld [vmem:[#allocation7 + $0x88] sm:$0xff]
    %v281 = vld [vmem:[#allocation7 + $0x90] sm:$0xff]
    %v282 = vld [vmem:[#allocation7 + $0x98] sm:$0xff]
    %v283 = vld [vmem:[#allocation7 + $0xa0] sm:$0xff]
    %v284 = vld [vmem:[#allocation7 + $0xa8] sm:$0xff]
    %v285 = vld [vmem:[#allocation7 + $0xb0] sm:$0xff]
    %v286 = vld [vmem:[#allocation7 + $0xb8] sm:$0xff]
    %v287 = vld [vmem:[#allocation7 + $0xc0] sm:$0xff]
    %v288 = vld [vmem:[#allocation7 + $0xc8] sm:$0xff]
    %v289 = vld [vmem:[#allocation7 + $0xd0] sm:$0xff]
    %v290 = vld [vmem:[#allocation7 + $0xd8] sm:$0xff]
    %v291 = vld [vmem:[#allocation7 + $0xe0] sm:$0xff]
    %v292 = vld [vmem:[#allocation7 + $0xe8] sm:$0xff]
    %v293 = vld [vmem:[#allocation7 + $0xf0] sm:$0xff]
    %v294 = vld [vmem:[#allocation7 + $0xf8] sm:$0xff]
    %v295 = vld [vmem:[#allocation7 + $0x100] sm:$0xff]
    %v296 = vld [vmem:[#allocation7 + $0x108] sm:$0xff]
    %v297 = vld [vmem:[#allocation7 + $0x110] sm:$0xff]
    %v298 = vld [vmem:[#allocation7 + $0x118] sm:$0xff]
    %v299 = vld [vmem:[#allocation7 + $0x120] sm:$0xff]
    %v300 = vld [vmem:[#allocation7 + $0x128] sm:$0xff]
    %v301 = vld [vmem:[#allocation7 + $0x130] sm:$0xff]
    %v302 = vld [vmem:[#allocation7 + $0x138] sm:$0xff]
    %v303 = vld [vmem:[#allocation7 + $0x140] sm:$0xff]
    %v304 = vld [vmem:[#allocation7 + $0x148] sm:$0xff]
    %v305 = vld [vmem:[#allocation7 + $0x150] sm:$0xff]
    %v306 = vld [vmem:[#allocation7 + $0x158] sm:$0xff]
    %v307 = vld [vmem:[#allocation7 + $0x160] sm:$0xff]
    %v308 = vld [vmem:[#allocation7 + $0x168] sm:$0xff]
    %v309 = vld [vmem:[#allocation7 + $0x170] sm:$0xff]
    %v310 = vld [vmem:[#allocation7 + $0x178] sm:$0xff]
    %v311 = vld [vmem:[#allocation7 + $0x180] sm:$0xff]
    %v312 = vld [vmem:[#allocation7 + $0x188] sm:$0xff]
    %v313 = vld [vmem:[#allocation7 + $0x190] sm:$0xff]
    %v314 = vld [vmem:[#allocation7 + $0x198] sm:$0xff]
    %v315 = vld [vmem:[#allocation7 + $0x1a0] sm:$0xff]
    %v316 = vld [vmem:[#allocation7 + $0x1a8] sm:$0xff]
    %v317 = vld [vmem:[#allocation7 + $0x1b0] sm:$0xff]
    %v318 = vld [vmem:[#allocation7 + $0x1b8] sm:$0xff]
    %v319 = vld [vmem:[#allocation7 + $0x1c0] sm:$0xff]
    %v320 = vld [vmem:[#allocation7 + $0x1c8] sm:$0xff]
    %v321 = vld [vmem:[#allocation7 + $0x1d0] sm:$0xff]
    %v322 = vld [vmem:[#allocation7 + $0x1d8] sm:$0xff]
    %v323 = vld [vmem:[#allocation7 + $0x1e0] sm:$0xff]
    %v324 = vld [vmem:[#allocation7 + $0x1e8] sm:$0xff]
    %v325 = vld [vmem:[#allocation7 + $0x1f0] sm:$0xff]
    %v326 = vld [vmem:[#allocation7 + $0x1f8] sm:$0xff]
    %v327 = vld [vmem:[#allocation7 + $0x200] sm:$0xff]
    %v328 = vld [vmem:[#allocation7 + $0x208] sm:$0xff]
    %v329 = vld [vmem:[#allocation7 + $0x210] sm:$0xff]
    %v330 = vld [vmem:[#allocation7 + $0x218] sm:$0xff]
    %v331 = vld [vmem:[#allocation7 + $0x220] sm:$0xff]
    %v332 = vld [vmem:[#allocation7 + $0x228] sm:$0xff]
    %v333 = vld [vmem:[#allocation7 + $0x230] sm:$0xff]
    %v334 = vld [vmem:[#allocation7 + $0x238] sm:$0xff]
    %v335 = vld [vmem:[#allocation7 + $0x240] sm:$0xff]
    %v336 = vld [vmem:[#allocation7 + $0x248] sm:$0xff]
    %v337 = vld [vmem:[#allocation7 + $0x250] sm:$0xff]
    %v338 = vld [vmem:[#allocation7 + $0x258] sm:$0xff]
    %v339 = vld [vmem:[#allocation7 + $0x260] sm:$0xff]
    %v340 = vld [vmem:[#allocation7 + $0x268] sm:$0xff]
    %v341 = vld [vmem:[#allocation7 + $0x270] sm:$0xff]
    %v342 = vld [vmem:[#allocation7 + $0x278] sm:$0xff]
    %v343 = vld [vmem:[#allocation7 + $0x280] sm:$0xff]
    %v344 = vld [vmem:[#allocation7 + $0x288] sm:$0xff]
    %v345 = vld [vmem:[#allocation7 + $0x290] sm:$0xff]
    %v346 = vld [vmem:[#allocation7 + $0x298] sm:$0xff]
    %v347 = vld [vmem:[#allocation7 + $0x2a0] sm:$0xff]
    %v348 = vld [vmem:[#allocation7 + $0x2a8] sm:$0xff]
    %v349 = vld [vmem:[#allocation7 + $0x2b0] sm:$0xff]
    %v350 = vld [vmem:[#allocation7 + $0x2b8] sm:$0xff]
    %v351 = vld [vmem:[#allocation7 + $0x2c0] sm:$0xff]
    %v352 = vld [vmem:[#allocation7 + $0x2c8] sm:$0xff]
    %v353 = vld [vmem:[#allocation7 + $0x2d0] sm:$0xff]
    %v354 = vld [vmem:[#allocation7 + $0x2d8] sm:$0xff]
    %v355 = vld [vmem:[#allocation7 + $0x2e0] sm:$0xff]
    %v356 = vld [vmem:[#allocation7 + $0x2e8] sm:$0xff]
    %v357 = vld [vmem:[#allocation7 + $0x2f0] sm:$0xff]
    %v358 = vld [vmem:[#allocation7 + $0x2f8] sm:$0xff]
    %v359 = vld [vmem:[#allocation7 + $0x300] sm:$0xff]
    %v360 = vld [vmem:[#allocation7 + $0x308] sm:$0xff]
    %v361 = vld [vmem:[#allocation7 + $0x310] sm:$0xff]
    %v362 = vld [vmem:[#allocation7 + $0x318] sm:$0xff]
    %v363 = vld [vmem:[#allocation7 + $0x320] sm:$0xff]
    %v364 = vld [vmem:[#allocation7 + $0x328] sm:$0xff]
    %v365 = vld [vmem:[#allocation7 + $0x330] sm:$0xff]
    %v366 = vld [vmem:[#allocation7 + $0x338] sm:$0xff]
    %v367 = vld [vmem:[#allocation7 + $0x340] sm:$0xff]
    %v368 = vld [vmem:[#allocation7 + $0x348] sm:$0xff]
    %v369 = vld [vmem:[#allocation7 + $0x350] sm:$0xff]
    %v370 = vld [vmem:[#allocation7 + $0x358] sm:$0xff]
    %v371 = vld [vmem:[#allocation7 + $0x360] sm:$0xff]
    %v372 = vld [vmem:[#allocation7 + $0x368] sm:$0xff]
    %v373 = vld [vmem:[#allocation7 + $0x370] sm:$0xff]
    %v374 = vld [vmem:[#allocation7 + $0x378] sm:$0xff]
    %v375 = vld [vmem:[#allocation7 + $0x380] sm:$0xff]
    %v376 = vld [vmem:[#allocation7 + $0x388] sm:$0xff]
    %v377 = vld [vmem:[#allocation7 + $0x390] sm:$0xff]
    %v378 = vld [vmem:[#allocation7 + $0x398] sm:$0xff]
    %v379 = vld [vmem:[#allocation7 + $0x3a0] sm:$0xff]
    %v380 = vld [vmem:[#allocation7 + $0x3a8] sm:$0xff]
    %v381 = vld [vmem:[#allocation7 + $0x3b0] sm:$0xff]
    %v382 = vld [vmem:[#allocation7 + $0x3b8] sm:$0xff]
    %v383 = vld [vmem:[#allocation7 + $0x3c0] sm:$0xff]
    %v384 = vld [vmem:[#allocation7 + $0x3c8] sm:$0xff]
    %v385 = vld [vmem:[#allocation7 + $0x3d0] sm:$0xff]
    %v386 = vld [vmem:[#allocation7 + $0x3d8] sm:$0xff]
    %v387 = vld [vmem:[#allocation7 + $0x3e0] sm:$0xff]
    %v388 = vld [vmem:[#allocation7 + $0x3e8] sm:$0xff]
    %v389 = vld [vmem:[#allocation7 + $0x3f0] sm:$0xff]
    %v390 = vld [vmem:[#allocation7 + $0x3f8] sm:$0xff]
    %v391 = vld [vmem:[#allocation7 + $0x400] sm:$0xff]
    %v392 = vld [vmem:[#allocation7 + $0x408] sm:$0xff]
    %v393 = vld [vmem:[#allocation7 + $0x410] sm:$0xff]
    %v394 = vld [vmem:[#allocation7 + $0x418] sm:$0xff]
    %v395 = vld [vmem:[#allocation7 + $0x420] sm:$0xff]
    %v396 = vld [vmem:[#allocation7 + $0x428] sm:$0xff]
    %v397 = vld [vmem:[#allocation7 + $0x430] sm:$0xff]
    %v398 = vld [vmem:[#allocation7 + $0x438] sm:$0xff]
    %v399 = vld [vmem:[#allocation7 + $0x440] sm:$0xff]
    %v400 = vld [vmem:[#allocation7 + $0x448] sm:$0xff]
    %v401 = vld [vmem:[#allocation7 + $0x450] sm:$0xff]
    %v402 = vld [vmem:[#allocation7 + $0x458] sm:$0xff]
    %v403 = vld [vmem:[#allocation7 + $0x460] sm:$0xff]
    %v404 = vld [vmem:[#allocation7 + $0x468] sm:$0xff]
    %v405 = vld [vmem:[#allocation7 + $0x470] sm:$0xff]
    %v406 = vld [vmem:[#allocation7 + $0x478] sm:$0xff]
    %v407 = vld [vmem:[#allocation7 + $0x480] sm:$0xff]
    %v408 = vld [vmem:[#allocation7 + $0x488] sm:$0xff]
    %v409 = vld [vmem:[#allocation7 + $0x490] sm:$0xff]
    %v410 = vld [vmem:[#allocation7 + $0x498] sm:$0xff]
    %v411 = vld [vmem:[#allocation7 + $0x4a0] sm:$0xff]
    %v412 = vld [vmem:[#allocation7 + $0x4a8] sm:$0xff]
    %v413 = vld [vmem:[#allocation7 + $0x4b0] sm:$0xff]
    %v414 = vld [vmem:[#allocation7 + $0x4b8] sm:$0xff]
    %v415 = vld [vmem:[#allocation7 + $0x4c0] sm:$0xff]
    %v416 = vld [vmem:[#allocation7 + $0x4c8] sm:$0xff]
    %v417 = vld [vmem:[#allocation7 + $0x4d0] sm:$0xff]
    %v418 = vld [vmem:[#allocation7 + $0x4d8] sm:$0xff]
    %v419 = vld [vmem:[#allocation7 + $0x4e0] sm:$0xff]
    %v420 = vld [vmem:[#allocation7 + $0x4e8] sm:$0xff]
    %v421 = vld [vmem:[#allocation7 + $0x4f0] sm:$0xff]
    %v422 = vld [vmem:[#allocation7 + $0x4f8] sm:$0xff]
    %v423 = vld [vmem:[#allocation7 + $0x500] sm:$0xff]
    %v424 = vld [vmem:[#allocation7 + $0x508] sm:$0xff]
    %v425 = vld [vmem:[#allocation7 + $0x510] sm:$0xff]
    %v426 = vld [vmem:[#allocation7 + $0x518] sm:$0xff]
    %v427 = vld [vmem:[#allocation7 + $0x520] sm:$0xff]
    %v428 = vld [vmem:[#allocation7 + $0x528] sm:$0xff]
    %v429 = vld [vmem:[#allocation7 + $0x530] sm:$0xff]
    %v430 = vld [vmem:[#allocation7 + $0x538] sm:$0xff]
    %v431 = vld [vmem:[#allocation7 + $0x540] sm:$0xff]
    %v432 = vld [vmem:[#allocation7 + $0x548] sm:$0xff]
    %v433 = vld [vmem:[#allocation7 + $0x550] sm:$0xff]
    %v434 = vld [vmem:[#allocation7 + $0x558] sm:$0xff]
    %v435 = vld [vmem:[#allocation7 + $0x560] sm:$0xff]
    %v436 = vld [vmem:[#allocation7 + $0x568] sm:$0xff]
    %v437 = vld [vmem:[#allocation7 + $0x570] sm:$0xff]
    %v438 = vld [vmem:[#allocation7 + $0x578] sm:$0xff]
    %v439 = vld [vmem:[#allocation7 + $0x580] sm:$0xff]
    %v440 = vld [vmem:[#allocation7 + $0x588] sm:$0xff]
    %v441 = vld [vmem:[#allocation7 + $0x590] sm:$0xff]
    %v442 = vld [vmem:[#allocation7 + $0x598] sm:$0xff]
    %v443 = vld [vmem:[#allocation7 + $0x5a0] sm:$0xff]
    %v444 = vld [vmem:[#allocation7 + $0x5a8] sm:$0xff]
    %v445 = vld [vmem:[#allocation7 + $0x5b0] sm:$0xff]
    %v446 = vld [vmem:[#allocation7 + $0x5b8] sm:$0xff]
    %v447 = vld [vmem:[#allocation7 + $0x5c0] sm:$0xff]
    %v448 = vld [vmem:[#allocation7 + $0x5c8] sm:$0xff]
    %v449 = vld [vmem:[#allocation7 + $0x5d0] sm:$0xff]
    %v450 = vld [vmem:[#allocation7 + $0x5d8] sm:$0xff]
    %v451 = vld [vmem:[#allocation7 + $0x5e0] sm:$0xff]
    %v452 = vld [vmem:[#allocation7 + $0x5e8] sm:$0xff]
    %v453 = vld [vmem:[#allocation7 + $0x5f0] sm:$0xff]
    %v454 = vld [vmem:[#allocation7 + $0x5f8] sm:$0xff]
    %v455 = vld [vmem:[#allocation7 + $0x600] sm:$0xff]
    %v456 = vld [vmem:[#allocation7 + $0x608] sm:$0xff]
    %v457 = vld [vmem:[#allocation7 + $0x610] sm:$0xff]
    %v458 = vld [vmem:[#allocation7 + $0x618] sm:$0xff]
    %v459 = vld [vmem:[#allocation7 + $0x620] sm:$0xff]
    %v460 = vld [vmem:[#allocation7 + $0x628] sm:$0xff]
    %v461 = vld [vmem:[#allocation7 + $0x630] sm:$0xff]
    %v462 = vld [vmem:[#allocation7 + $0x638] sm:$0xff]
    %v463 = vld [vmem:[#allocation7 + $0x640] sm:$0xff]
    %v464 = vld [vmem:[#allocation7 + $0x648] sm:$0xff]
    %v465 = vld [vmem:[#allocation7 + $0x650] sm:$0xff]
    %v466 = vld [vmem:[#allocation7 + $0x658] sm:$0xff]
    %v467 = vld [vmem:[#allocation7 + $0x660] sm:$0xff]
    %v468 = vld [vmem:[#allocation7 + $0x668] sm:$0xff]
    %v469 = vld [vmem:[#allocation7 + $0x670] sm:$0xff]
    %v470 = vld [vmem:[#allocation7 + $0x678] sm:$0xff]
    %v471 = vld [vmem:[#allocation7 + $0x680] sm:$0xff]
    %v472 = vld [vmem:[#allocation7 + $0x688] sm:$0xff]
    %v473 = vld [vmem:[#allocation7 + $0x690] sm:$0xff]
    %v474 = vld [vmem:[#allocation7 + $0x698] sm:$0xff]
    %v475 = vld [vmem:[#allocation7 + $0x6a0] sm:$0xff]
    %v476 = vld [vmem:[#allocation7 + $0x6a8] sm:$0xff]
    %v477 = vld [vmem:[#allocation7 + $0x6b0] sm:$0xff]
    %v478 = vld [vmem:[#allocation7 + $0x6b8] sm:$0xff]
    %v479 = vld [vmem:[#allocation7 + $0x6c0] sm:$0xff]
    %v480 = vld [vmem:[#allocation7 + $0x6c8] sm:$0xff]
    %v481 = vld [vmem:[#allocation7 + $0x6d0] sm:$0xff]
    %v482 = vld [vmem:[#allocation7 + $0x6d8] sm:$0xff]
    %v483 = vld [vmem:[#allocation7 + $0x6e0] sm:$0xff]
    %v484 = vld [vmem:[#allocation7 + $0x6e8] sm:$0xff]
    %v485 = vld [vmem:[#allocation7 + $0x6f0] sm:$0xff]
    %v486 = vld [vmem:[#allocation7 + $0x6f8] sm:$0xff]
    %v487 = vld [vmem:[%s5] sm:$0xf]
    %v489 = vlaneseq
    %v490 = vshrl.u32 %v489, 7
    %v491 = vsub.s32 0, %v490
    %v492 = vrot.slane %v487, %v491
    %v493 = vlaneseq
    %v494 = vshrl.u32 %v493, 7
    %v495 = vsub.s32 1, %v494
    %v496 = vrot.slane %v487, %v495
    %v497 = vlaneseq
    %v498 = vshrl.u32 %v497, 7
    %v499 = vsub.s32 2, %v498
    %v500 = vrot.slane %v487, %v499
    %v501 = vlaneseq
    %v502 = vshrl.u32 %v501, 7
    %v503 = vsub.s32 3, %v502
    %v504 = vrot.slane %v487, %v503
    %v517 = vunpack.c.l.b16 %v255
    %v518 = vunpack.c.h.b16 %v255
    %v519 = vunpack.c.l.b16 %v256
    %v520 = vunpack.c.h.b16 %v256
    %v521 = vunpack.c.l.b16 %v257
    %v522 = vunpack.c.h.b16 %v257
    %v523 = vunpack.c.l.b16 %v258
    %v524 = vunpack.c.l.b16 %v259
    %v525 = vunpack.c.h.b16 %v259
    %v526 = vunpack.c.l.b16 %v260
    %v527 = vunpack.c.h.b16 %v260
    %v528 = vunpack.c.l.b16 %v261
    %v529 = vunpack.c.h.b16 %v261
    %v530 = vunpack.c.l.b16 %v262
    %v531 = vpack.c.b16 %v524, %v517
    %v532 = vpack.c.b16 %v525, %v518
    %v533 = vpack.c.b16 %v526, %v519
    %v534 = vpack.c.b16 %v527, %v520
    %v535 = vpack.c.b16 %v528, %v521
    %v536 = vpack.c.b16 %v529, %v522
    %v537 = vpack.c.b16 %v530, %v523
    %v769 = vunpack.c.l.b16 %v263
    %v770 = vunpack.c.h.b16 %v263
    %v771 = vunpack.c.l.b16 %v264
    %v772 = vunpack.c.h.b16 %v264
    %v773 = vunpack.c.l.b16 %v265
    %v774 = vunpack.c.h.b16 %v265
    %v775 = vunpack.c.l.b16 %v266
    %v776 = vunpack.c.h.b16 %v266
    %v777 = vunpack.c.l.b16 %v267
    %v778 = vunpack.c.h.b16 %v267
    %v779 = vunpack.c.l.b16 %v268
    %v780 = vunpack.c.h.b16 %v268
    %v781 = vunpack.c.l.b16 %v269
    %v782 = vunpack.c.h.b16 %v269
    %v783 = vunpack.c.l.b16 %v270
    %v784 = vunpack.c.h.b16 %v270
    %v785 = vunpack.c.l.b16 %v271
    %v786 = vunpack.c.h.b16 %v271
    %v787 = vunpack.c.l.b16 %v272
    %v788 = vunpack.c.h.b16 %v272
    %v789 = vunpack.c.l.b16 %v273
    %v790 = vunpack.c.h.b16 %v273
    %v791 = vunpack.c.l.b16 %v274
    %v792 = vunpack.c.h.b16 %v274
    %v793 = vunpack.c.l.b16 %v275
    %v794 = vunpack.c.h.b16 %v275
    %v795 = vunpack.c.l.b16 %v276
    %v796 = vunpack.c.h.b16 %v276
    %v797 = vunpack.c.l.b16 %v277
    %v798 = vunpack.c.h.b16 %v277
    %v799 = vunpack.c.l.b16 %v278
    %v800 = vunpack.c.h.b16 %v278
    %v801 = vunpack.c.l.b16 %v279
    %v802 = vunpack.c.h.b16 %v279
    %v803 = vunpack.c.l.b16 %v280
    %v804 = vunpack.c.h.b16 %v280
    %v805 = vunpack.c.l.b16 %v281
    %v806 = vunpack.c.h.b16 %v281
    %v807 = vunpack.c.l.b16 %v282
    %v808 = vunpack.c.h.b16 %v282
    %v809 = vunpack.c.l.b16 %v283
    %v810 = vunpack.c.h.b16 %v283
    %v811 = vunpack.c.l.b16 %v284
    %v812 = vunpack.c.h.b16 %v284
    %v813 = vunpack.c.l.b16 %v285
    %v814 = vunpack.c.h.b16 %v285
    %v815 = vunpack.c.l.b16 %v286
    %v816 = vunpack.c.h.b16 %v286
    %v817 = vunpack.c.l.b16 %v287
    %v818 = vunpack.c.h.b16 %v287
    %v819 = vunpack.c.l.b16 %v288
    %v820 = vunpack.c.h.b16 %v288
    %v821 = vunpack.c.l.b16 %v289
    %v822 = vunpack.c.h.b16 %v289
    %v823 = vunpack.c.l.b16 %v290
    %v824 = vunpack.c.h.b16 %v290
    %v825 = vunpack.c.l.b16 %v291
    %v826 = vunpack.c.h.b16 %v291
    %v827 = vunpack.c.l.b16 %v292
    %v828 = vunpack.c.h.b16 %v292
    %v829 = vunpack.c.l.b16 %v293
    %v830 = vunpack.c.h.b16 %v293
    %v831 = vunpack.c.l.b16 %v294
    %v832 = vunpack.c.h.b16 %v294
    %v833 = vunpack.c.l.b16 %v295
    %v834 = vunpack.c.h.b16 %v295
    %v835 = vunpack.c.l.b16 %v296
    %v836 = vunpack.c.h.b16 %v296
    %v837 = vunpack.c.l.b16 %v297
    %v838 = vunpack.c.h.b16 %v297
    %v839 = vunpack.c.l.b16 %v298
    %v840 = vunpack.c.h.b16 %v298
    %v841 = vunpack.c.l.b16 %v299
    %v842 = vunpack.c.h.b16 %v299
    %v843 = vunpack.c.l.b16 %v300
    %v844 = vunpack.c.h.b16 %v300
    %v845 = vunpack.c.l.b16 %v301
    %v846 = vunpack.c.h.b16 %v301
    %v847 = vunpack.c.l.b16 %v302
    %v848 = vunpack.c.h.b16 %v302
    %v849 = vunpack.c.l.b16 %v303
    %v850 = vunpack.c.h.b16 %v303
    %v851 = vunpack.c.l.b16 %v304
    %v852 = vunpack.c.h.b16 %v304
    %v853 = vunpack.c.l.b16 %v305
    %v854 = vunpack.c.h.b16 %v305
    %v855 = vunpack.c.l.b16 %v306
    %v856 = vunpack.c.h.b16 %v306
    %v857 = vunpack.c.l.b16 %v307
    %v858 = vunpack.c.h.b16 %v307
    %v859 = vunpack.c.l.b16 %v308
    %v860 = vunpack.c.h.b16 %v308
    %v861 = vunpack.c.l.b16 %v309
    %v862 = vunpack.c.h.b16 %v309
    %v863 = vunpack.c.l.b16 %v310
    %v864 = vunpack.c.h.b16 %v310
    %v865 = vunpack.c.l.b16 %v311
    %v866 = vunpack.c.h.b16 %v311
    %v867 = vunpack.c.l.b16 %v312
    %v868 = vunpack.c.h.b16 %v312
    %v869 = vunpack.c.l.b16 %v313
    %v870 = vunpack.c.h.b16 %v313
    %v871 = vunpack.c.l.b16 %v314
    %v872 = vunpack.c.h.b16 %v314
    %v873 = vunpack.c.l.b16 %v315
    %v874 = vunpack.c.h.b16 %v315
    %v875 = vunpack.c.l.b16 %v316
    %v876 = vunpack.c.h.b16 %v316
    %v877 = vunpack.c.l.b16 %v317
    %v878 = vunpack.c.h.b16 %v317
    %v879 = vunpack.c.l.b16 %v318
    %v880 = vunpack.c.h.b16 %v318
    %v881 = vunpack.c.l.b16 %v319
    %v882 = vunpack.c.h.b16 %v319
    %v883 = vunpack.c.l.b16 %v320
    %v884 = vunpack.c.h.b16 %v320
    %v885 = vunpack.c.l.b16 %v321
    %v886 = vunpack.c.h.b16 %v321
    %v887 = vunpack.c.l.b16 %v322
    %v888 = vunpack.c.h.b16 %v322
    %v889 = vunpack.c.l.b16 %v323
    %v890 = vunpack.c.h.b16 %v323
    %v891 = vunpack.c.l.b16 %v324
    %v892 = vunpack.c.h.b16 %v324
    %v893 = vunpack.c.l.b16 %v325
    %v894 = vunpack.c.h.b16 %v325
    %v895 = vunpack.c.l.b16 %v326
    %v896 = vunpack.c.h.b16 %v326
    %v897 = vunpack.c.l.b16 %v327
    %v898 = vunpack.c.h.b16 %v327
    %v899 = vunpack.c.l.b16 %v328
    %v900 = vunpack.c.h.b16 %v328
    %v901 = vunpack.c.l.b16 %v329
    %v902 = vunpack.c.h.b16 %v329
    %v903 = vunpack.c.l.b16 %v330
    %v904 = vunpack.c.h.b16 %v330
    %v905 = vunpack.c.l.b16 %v331
    %v906 = vunpack.c.h.b16 %v331
    %v907 = vunpack.c.l.b16 %v332
    %v908 = vunpack.c.h.b16 %v332
    %v909 = vunpack.c.l.b16 %v333
    %v910 = vunpack.c.h.b16 %v333
    %v911 = vunpack.c.l.b16 %v334
    %v912 = vunpack.c.h.b16 %v334
    %v913 = vunpack.c.l.b16 %v335
    %v914 = vunpack.c.h.b16 %v335
    %v915 = vunpack.c.l.b16 %v336
    %v916 = vunpack.c.h.b16 %v336
    %v917 = vunpack.c.l.b16 %v337
    %v918 = vunpack.c.h.b16 %v337
    %v919 = vunpack.c.l.b16 %v338
    %v920 = vunpack.c.h.b16 %v338
    %v921 = vunpack.c.l.b16 %v339
    %v922 = vunpack.c.h.b16 %v339
    %v923 = vunpack.c.l.b16 %v340
    %v924 = vunpack.c.h.b16 %v340
    %v925 = vunpack.c.l.b16 %v341
    %v926 = vunpack.c.h.b16 %v341
    %v927 = vunpack.c.l.b16 %v342
    %v928 = vunpack.c.h.b16 %v342
    %v929 = vunpack.c.l.b16 %v343
    %v930 = vunpack.c.h.b16 %v343
    %v931 = vunpack.c.l.b16 %v344
    %v932 = vunpack.c.h.b16 %v344
    %v933 = vunpack.c.l.b16 %v345
    %v934 = vunpack.c.h.b16 %v345
    %v935 = vunpack.c.l.b16 %v346
    %v936 = vunpack.c.h.b16 %v346
    %v937 = vunpack.c.l.b16 %v347
    %v938 = vunpack.c.h.b16 %v347
    %v939 = vunpack.c.l.b16 %v348
    %v940 = vunpack.c.h.b16 %v348
    %v941 = vunpack.c.l.b16 %v349
    %v942 = vunpack.c.h.b16 %v349
    %v943 = vunpack.c.l.b16 %v350
    %v944 = vunpack.c.h.b16 %v350
    %v945 = vunpack.c.l.b16 %v351
    %v946 = vunpack.c.h.b16 %v351
    %v947 = vunpack.c.l.b16 %v352
    %v948 = vunpack.c.h.b16 %v352
    %v949 = vunpack.c.l.b16 %v353
    %v950 = vunpack.c.h.b16 %v353
    %v951 = vunpack.c.l.b16 %v354
    %v952 = vunpack.c.h.b16 %v354
    %v953 = vunpack.c.l.b16 %v355
    %v954 = vunpack.c.h.b16 %v355
    %v955 = vunpack.c.l.b16 %v356
    %v956 = vunpack.c.h.b16 %v356
    %v957 = vunpack.c.l.b16 %v357
    %v958 = vunpack.c.h.b16 %v357
    %v959 = vunpack.c.l.b16 %v358
    %v960 = vunpack.c.h.b16 %v358
    %v961 = vunpack.c.l.b16 %v359
    %v962 = vunpack.c.h.b16 %v359
    %v963 = vunpack.c.l.b16 %v360
    %v964 = vunpack.c.h.b16 %v360
    %v965 = vunpack.c.l.b16 %v361
    %v966 = vunpack.c.h.b16 %v361
    %v967 = vunpack.c.l.b16 %v362
    %v968 = vunpack.c.h.b16 %v362
    %v969 = vunpack.c.l.b16 %v363
    %v970 = vunpack.c.h.b16 %v363
    %v971 = vunpack.c.l.b16 %v364
    %v972 = vunpack.c.h.b16 %v364
    %v973 = vunpack.c.l.b16 %v365
    %v974 = vunpack.c.h.b16 %v365
    %v975 = vunpack.c.l.b16 %v366
    %v976 = vunpack.c.h.b16 %v366
    %v977 = vunpack.c.l.b16 %v367
    %v978 = vunpack.c.h.b16 %v367
    %v979 = vunpack.c.l.b16 %v368
    %v980 = vunpack.c.h.b16 %v368
    %v981 = vunpack.c.l.b16 %v369
    %v982 = vunpack.c.h.b16 %v369
    %v983 = vunpack.c.l.b16 %v370
    %v984 = vunpack.c.h.b16 %v370
    %v985 = vunpack.c.l.b16 %v371
    %v986 = vunpack.c.h.b16 %v371
    %v987 = vunpack.c.l.b16 %v372
    %v988 = vunpack.c.h.b16 %v372
    %v989 = vunpack.c.l.b16 %v373
    %v990 = vunpack.c.h.b16 %v373
    %v991 = vunpack.c.l.b16 %v374
    %v992 = vunpack.c.h.b16 %v374
    %v993 = vunpack.c.l.b16 %v375
    %v994 = vunpack.c.h.b16 %v375
    %v995 = vunpack.c.l.b16 %v376
    %v996 = vunpack.c.h.b16 %v376
    %v997 = vunpack.c.l.b16 %v377
    %v998 = vunpack.c.h.b16 %v377
    %v999 = vunpack.c.l.b16 %v378
    %v1000 = vunpack.c.h.b16 %v378
    %v1001 = vunpack.c.l.b16 %v379
    %v1002 = vunpack.c.h.b16 %v379
    %v1003 = vunpack.c.l.b16 %v380
    %v1004 = vunpack.c.h.b16 %v380
    %v1005 = vunpack.c.l.b16 %v381
    %v1006 = vunpack.c.h.b16 %v381
    %v1007 = vunpack.c.l.b16 %v382
    %v1008 = vunpack.c.h.b16 %v382
    %v1009 = vunpack.c.l.b16 %v383
    %v1010 = vunpack.c.h.b16 %v383
    %v1011 = vunpack.c.l.b16 %v384
    %v1012 = vunpack.c.h.b16 %v384
    %v1013 = vunpack.c.l.b16 %v385
    %v1014 = vunpack.c.h.b16 %v385
    %v1015 = vunpack.c.l.b16 %v386
    %v1016 = vunpack.c.h.b16 %v386
    %v1017 = vunpack.c.l.b16 %v387
    %v1018 = vunpack.c.h.b16 %v387
    %v1019 = vunpack.c.l.b16 %v388
    %v1020 = vunpack.c.h.b16 %v388
    %v1021 = vunpack.c.l.b16 %v389
    %v1022 = vunpack.c.h.b16 %v389
    %v1023 = vunpack.c.l.b16 %v390
    %v1024 = vunpack.c.h.b16 %v390
    %v1025 = vunpack.c.l.b16 %v391
    %v1026 = vunpack.c.h.b16 %v391
    %v1027 = vunpack.c.l.b16 %v392
    %v1028 = vunpack.c.h.b16 %v392
    %v1029 = vunpack.c.l.b16 %v393
    %v1030 = vunpack.c.h.b16 %v393
    %v1031 = vunpack.c.l.b16 %v394
    %v1032 = vunpack.c.h.b16 %v394
    %v1033 = vunpack.c.l.b16 %v395
    %v1034 = vunpack.c.h.b16 %v395
    %v1035 = vunpack.c.l.b16 %v396
    %v1036 = vunpack.c.h.b16 %v396
    %v1037 = vunpack.c.l.b16 %v397
    %v1038 = vunpack.c.h.b16 %v397
    %v1039 = vunpack.c.l.b16 %v398
    %v1040 = vunpack.c.h.b16 %v398
    %v1041 = vunpack.c.l.b16 %v399
    %v1042 = vunpack.c.h.b16 %v399
    %v1043 = vunpack.c.l.b16 %v400
    %v1044 = vunpack.c.h.b16 %v400
    %v1045 = vunpack.c.l.b16 %v401
    %v1046 = vunpack.c.h.b16 %v401
    %v1047 = vunpack.c.l.b16 %v402
    %v1048 = vunpack.c.h.b16 %v402
    %v1049 = vunpack.c.l.b16 %v403
    %v1050 = vunpack.c.h.b16 %v403
    %v1051 = vunpack.c.l.b16 %v404
    %v1052 = vunpack.c.h.b16 %v404
    %v1053 = vunpack.c.l.b16 %v405
    %v1054 = vunpack.c.h.b16 %v405
    %v1055 = vunpack.c.l.b16 %v406
    %v1056 = vunpack.c.h.b16 %v406
    %v1057 = vunpack.c.l.b16 %v407
    %v1058 = vunpack.c.h.b16 %v407
    %v1059 = vunpack.c.l.b16 %v408
    %v1060 = vunpack.c.h.b16 %v408
    %v1061 = vunpack.c.l.b16 %v409
    %v1062 = vunpack.c.h.b16 %v409
    %v1063 = vunpack.c.l.b16 %v410
    %v1064 = vunpack.c.h.b16 %v410
    %v1065 = vunpack.c.l.b16 %v411
    %v1066 = vunpack.c.h.b16 %v411
    %v1067 = vunpack.c.l.b16 %v412
    %v1068 = vunpack.c.h.b16 %v412
    %v1069 = vunpack.c.l.b16 %v413
    %v1070 = vunpack.c.h.b16 %v413
    %v1071 = vunpack.c.l.b16 %v414
    %v1072 = vunpack.c.h.b16 %v414
    %v1073 = vunpack.c.l.b16 %v415
    %v1074 = vunpack.c.h.b16 %v415
    %v1075 = vunpack.c.l.b16 %v416
    %v1076 = vunpack.c.h.b16 %v416
    %v1077 = vunpack.c.l.b16 %v417
    %v1078 = vunpack.c.h.b16 %v417
    %v1079 = vunpack.c.l.b16 %v418
    %v1080 = vunpack.c.h.b16 %v418
    %v1081 = vunpack.c.l.b16 %v419
    %v1082 = vunpack.c.h.b16 %v419
    %v1083 = vunpack.c.l.b16 %v420
    %v1084 = vunpack.c.h.b16 %v420
    %v1085 = vunpack.c.l.b16 %v421
    %v1086 = vunpack.c.h.b16 %v421
    %v1087 = vunpack.c.l.b16 %v422
    %v1088 = vunpack.c.h.b16 %v422
    %v1089 = vunpack.c.l.b16 %v423
    %v1090 = vunpack.c.h.b16 %v423
    %v1091 = vunpack.c.l.b16 %v424
    %v1092 = vunpack.c.h.b16 %v424
    %v1093 = vunpack.c.l.b16 %v425
    %v1094 = vunpack.c.h.b16 %v425
    %v1095 = vunpack.c.l.b16 %v426
    %v1096 = vunpack.c.h.b16 %v426
    %v1097 = vunpack.c.l.b16 %v427
    %v1098 = vunpack.c.h.b16 %v427
    %v1099 = vunpack.c.l.b16 %v428
    %v1100 = vunpack.c.h.b16 %v428
    %v1101 = vunpack.c.l.b16 %v429
    %v1102 = vunpack.c.h.b16 %v429
    %v1103 = vunpack.c.l.b16 %v430
    %v1104 = vunpack.c.h.b16 %v430
    %v1105 = vunpack.c.l.b16 %v431
    %v1106 = vunpack.c.h.b16 %v431
    %v1107 = vunpack.c.l.b16 %v432
    %v1108 = vunpack.c.h.b16 %v432
    %v1109 = vunpack.c.l.b16 %v433
    %v1110 = vunpack.c.h.b16 %v433
    %v1111 = vunpack.c.l.b16 %v434
    %v1112 = vunpack.c.h.b16 %v434
    %v1113 = vunpack.c.l.b16 %v435
    %v1114 = vunpack.c.h.b16 %v435
    %v1115 = vunpack.c.l.b16 %v436
    %v1116 = vunpack.c.h.b16 %v436
    %v1117 = vunpack.c.l.b16 %v437
    %v1118 = vunpack.c.h.b16 %v437
    %v1119 = vunpack.c.l.b16 %v438
    %v1120 = vunpack.c.h.b16 %v438
    %v1121 = vunpack.c.l.b16 %v439
    %v1122 = vunpack.c.h.b16 %v439
    %v1123 = vunpack.c.l.b16 %v440
    %v1124 = vunpack.c.h.b16 %v440
    %v1125 = vunpack.c.l.b16 %v441
    %v1126 = vunpack.c.h.b16 %v441
    %v1127 = vunpack.c.l.b16 %v442
    %v1128 = vunpack.c.h.b16 %v442
    %v1129 = vunpack.c.l.b16 %v443
    %v1130 = vunpack.c.h.b16 %v443
    %v1131 = vunpack.c.l.b16 %v444
    %v1132 = vunpack.c.h.b16 %v444
    %v1133 = vunpack.c.l.b16 %v445
    %v1134 = vunpack.c.h.b16 %v445
    %v1135 = vunpack.c.l.b16 %v446
    %v1136 = vunpack.c.h.b16 %v446
    %v1137 = vunpack.c.l.b16 %v447
    %v1138 = vunpack.c.h.b16 %v447
    %v1139 = vunpack.c.l.b16 %v448
    %v1140 = vunpack.c.h.b16 %v448
    %v1141 = vunpack.c.l.b16 %v449
    %v1142 = vunpack.c.h.b16 %v449
    %v1143 = vunpack.c.l.b16 %v450
    %v1144 = vunpack.c.h.b16 %v450
    %v1145 = vunpack.c.l.b16 %v451
    %v1146 = vunpack.c.h.b16 %v451
    %v1147 = vunpack.c.l.b16 %v452
    %v1148 = vunpack.c.h.b16 %v452
    %v1149 = vunpack.c.l.b16 %v453
    %v1150 = vunpack.c.h.b16 %v453
    %v1151 = vunpack.c.l.b16 %v454
    %v1152 = vunpack.c.h.b16 %v454
    %v1153 = vunpack.c.l.b16 %v455
    %v1154 = vunpack.c.h.b16 %v455
    %v1155 = vunpack.c.l.b16 %v456
    %v1156 = vunpack.c.h.b16 %v456
    %v1157 = vunpack.c.l.b16 %v457
    %v1158 = vunpack.c.h.b16 %v457
    %v1159 = vunpack.c.l.b16 %v458
    %v1160 = vunpack.c.h.b16 %v458
    %v1161 = vunpack.c.l.b16 %v459
    %v1162 = vunpack.c.h.b16 %v459
    %v1163 = vunpack.c.l.b16 %v460
    %v1164 = vunpack.c.h.b16 %v460
    %v1165 = vunpack.c.l.b16 %v461
    %v1166 = vunpack.c.h.b16 %v461
    %v1167 = vunpack.c.l.b16 %v462
    %v1168 = vunpack.c.h.b16 %v462
    %v1169 = vunpack.c.l.b16 %v463
    %v1170 = vunpack.c.h.b16 %v463
    %v1171 = vunpack.c.l.b16 %v464
    %v1172 = vunpack.c.h.b16 %v464
    %v1173 = vunpack.c.l.b16 %v465
    %v1174 = vunpack.c.h.b16 %v465
    %v1175 = vunpack.c.l.b16 %v466
    %v1176 = vunpack.c.h.b16 %v466
    %v1177 = vunpack.c.l.b16 %v467
    %v1178 = vunpack.c.h.b16 %v467
    %v1179 = vunpack.c.l.b16 %v468
    %v1180 = vunpack.c.h.b16 %v468
    %v1181 = vunpack.c.l.b16 %v469
    %v1182 = vunpack.c.h.b16 %v469
    %v1183 = vunpack.c.l.b16 %v470
    %v1184 = vunpack.c.h.b16 %v470
    %v1185 = vunpack.c.l.b16 %v471
    %v1186 = vunpack.c.h.b16 %v471
    %v1187 = vunpack.c.l.b16 %v472
    %v1188 = vunpack.c.h.b16 %v472
    %v1189 = vunpack.c.l.b16 %v473
    %v1190 = vunpack.c.h.b16 %v473
    %v1191 = vunpack.c.l.b16 %v474
    %v1192 = vunpack.c.h.b16 %v474
    %v1193 = vunpack.c.l.b16 %v475
    %v1194 = vunpack.c.h.b16 %v475
    %v1195 = vunpack.c.l.b16 %v476
    %v1196 = vunpack.c.h.b16 %v476
    %v1197 = vunpack.c.l.b16 %v477
    %v1198 = vunpack.c.h.b16 %v477
    %v1199 = vunpack.c.l.b16 %v478
    %v1200 = vunpack.c.h.b16 %v478
    %v1201 = vunpack.c.l.b16 %v479
    %v1202 = vunpack.c.h.b16 %v479
    %v1203 = vunpack.c.l.b16 %v480
    %v1204 = vunpack.c.h.b16 %v480
    %v1205 = vunpack.c.l.b16 %v481
    %v1206 = vunpack.c.h.b16 %v481
    %v1207 = vunpack.c.l.b16 %v482
    %v1208 = vunpack.c.h.b16 %v482
    %v1209 = vunpack.c.l.b16 %v483
    %v1210 = vunpack.c.h.b16 %v483
    %v1211 = vunpack.c.l.b16 %v484
    %v1212 = vunpack.c.h.b16 %v484
    %v1213 = vunpack.c.l.b16 %v485
    %v1214 = vunpack.c.h.b16 %v485
    %v1215 = vunpack.c.l.b16 %v486
    %v1216 = vunpack.c.h.b16 %v486
    %v1217 = vpack.c.b16 %v773, %v769
    %v1218 = vpack.c.b16 %v774, %v770
    %v1219 = vpack.c.b16 %v775, %v771
    %v1220 = vpack.c.b16 %v776, %v772
    %v1221 = vpack.c.b16 %v781, %v777
    %v1222 = vpack.c.b16 %v782, %v778
    %v1223 = vpack.c.b16 %v783, %v779
    %v1224 = vpack.c.b16 %v784, %v780
    %v1225 = vpack.c.b16 %v789, %v785
    %v1226 = vpack.c.b16 %v790, %v786
    %v1227 = vpack.c.b16 %v791, %v787
    %v1228 = vpack.c.b16 %v792, %v788
    %v1229 = vpack.c.b16 %v797, %v793
    %v1230 = vpack.c.b16 %v798, %v794
    %v1231 = vpack.c.b16 %v799, %v795
    %v1232 = vpack.c.b16 %v800, %v796
    %v1233 = vpack.c.b16 %v805, %v801
    %v1234 = vpack.c.b16 %v806, %v802
    %v1235 = vpack.c.b16 %v807, %v803
    %v1236 = vpack.c.b16 %v808, %v804
    %v1237 = vpack.c.b16 %v813, %v809
    %v1238 = vpack.c.b16 %v814, %v810
    %v1239 = vpack.c.b16 %v815, %v811
    %v1240 = vpack.c.b16 %v816, %v812
    %v1241 = vpack.c.b16 %v821, %v817
    %v1242 = vpack.c.b16 %v822, %v818
    %v1243 = vpack.c.b16 %v823, %v819
    %v1244 = vpack.c.b16 %v824, %v820
    %v1245 = vpack.c.b16 %v829, %v825
    %v1246 = vpack.c.b16 %v830, %v826
    %v1247 = vpack.c.b16 %v831, %v827
    %v1248 = vpack.c.b16 %v832, %v828
    %v1249 = vpack.c.b16 %v837, %v833
    %v1250 = vpack.c.b16 %v838, %v834
    %v1251 = vpack.c.b16 %v839, %v835
    %v1252 = vpack.c.b16 %v840, %v836
    %v1253 = vpack.c.b16 %v845, %v841
    %v1254 = vpack.c.b16 %v846, %v842
    %v1255 = vpack.c.b16 %v847, %v843
    %v1256 = vpack.c.b16 %v848, %v844
    %v1257 = vpack.c.b16 %v853, %v849
    %v1258 = vpack.c.b16 %v854, %v850
    %v1259 = vpack.c.b16 %v855, %v851
    %v1260 = vpack.c.b16 %v856, %v852
    %v1261 = vpack.c.b16 %v861, %v857
    %v1262 = vpack.c.b16 %v862, %v858
    %v1263 = vpack.c.b16 %v863, %v859
    %v1264 = vpack.c.b16 %v864, %v860
    %v1265 = vpack.c.b16 %v869, %v865
    %v1266 = vpack.c.b16 %v870, %v866
    %v1267 = vpack.c.b16 %v871, %v867
    %v1268 = vpack.c.b16 %v872, %v868
    %v1269 = vpack.c.b16 %v877, %v873
    %v1270 = vpack.c.b16 %v878, %v874
    %v1271 = vpack.c.b16 %v879, %v875
    %v1272 = vpack.c.b16 %v880, %v876
    %v1273 = vpack.c.b16 %v885, %v881
    %v1274 = vpack.c.b16 %v886, %v882
    %v1275 = vpack.c.b16 %v887, %v883
    %v1276 = vpack.c.b16 %v888, %v884
    %v1277 = vpack.c.b16 %v893, %v889
    %v1278 = vpack.c.b16 %v894, %v890
    %v1279 = vpack.c.b16 %v895, %v891
    %v1280 = vpack.c.b16 %v896, %v892
    %v1281 = vpack.c.b16 %v901, %v897
    %v1282 = vpack.c.b16 %v902, %v898
    %v1283 = vpack.c.b16 %v903, %v899
    %v1284 = vpack.c.b16 %v904, %v900
    %v1285 = vpack.c.b16 %v909, %v905
    %v1286 = vpack.c.b16 %v910, %v906
    %v1287 = vpack.c.b16 %v911, %v907
    %v1288 = vpack.c.b16 %v912, %v908
    %v1289 = vpack.c.b16 %v917, %v913
    %v1290 = vpack.c.b16 %v918, %v914
    %v1291 = vpack.c.b16 %v919, %v915
    %v1292 = vpack.c.b16 %v920, %v916
    %v1293 = vpack.c.b16 %v925, %v921
    %v1294 = vpack.c.b16 %v926, %v922
    %v1295 = vpack.c.b16 %v927, %v923
    %v1296 = vpack.c.b16 %v928, %v924
    %v1297 = vpack.c.b16 %v933, %v929
    %v1298 = vpack.c.b16 %v934, %v930
    %v1299 = vpack.c.b16 %v935, %v931
    %v1300 = vpack.c.b16 %v936, %v932
    %v1301 = vpack.c.b16 %v941, %v937
    %v1302 = vpack.c.b16 %v942, %v938
    %v1303 = vpack.c.b16 %v943, %v939
    %v1304 = vpack.c.b16 %v944, %v940
    %v1305 = vpack.c.b16 %v949, %v945
    %v1306 = vpack.c.b16 %v950, %v946
    %v1307 = vpack.c.b16 %v951, %v947
    %v1308 = vpack.c.b16 %v952, %v948
    %v1309 = vpack.c.b16 %v957, %v953
    %v1310 = vpack.c.b16 %v958, %v954
    %v1311 = vpack.c.b16 %v959, %v955
    %v1312 = vpack.c.b16 %v960, %v956
    %v1313 = vpack.c.b16 %v965, %v961
    %v1314 = vpack.c.b16 %v966, %v962
    %v1315 = vpack.c.b16 %v967, %v963
    %v1316 = vpack.c.b16 %v968, %v964
    %v1317 = vpack.c.b16 %v973, %v969
    %v1318 = vpack.c.b16 %v974, %v970
    %v1319 = vpack.c.b16 %v975, %v971
    %v1320 = vpack.c.b16 %v976, %v972
    %v1321 = vpack.c.b16 %v981, %v977
    %v1322 = vpack.c.b16 %v982, %v978
    %v1323 = vpack.c.b16 %v983, %v979
    %v1324 = vpack.c.b16 %v984, %v980
    %v1325 = vpack.c.b16 %v989, %v985
    %v1326 = vpack.c.b16 %v990, %v986
    %v1327 = vpack.c.b16 %v991, %v987
    %v1328 = vpack.c.b16 %v992, %v988
    %v1329 = vpack.c.b16 %v997, %v993
    %v1330 = vpack.c.b16 %v998, %v994
    %v1331 = vpack.c.b16 %v999, %v995
    %v1332 = vpack.c.b16 %v1000, %v996
    %v1333 = vpack.c.b16 %v1005, %v1001
    %v1334 = vpack.c.b16 %v1006, %v1002
    %v1335 = vpack.c.b16 %v1007, %v1003
    %v1336 = vpack.c.b16 %v1008, %v1004
    %v1337 = vpack.c.b16 %v1013, %v1009
    %v1338 = vpack.c.b16 %v1014, %v1010
    %v1339 = vpack.c.b16 %v1015, %v1011
    %v1340 = vpack.c.b16 %v1016, %v1012
    %v1341 = vpack.c.b16 %v1021, %v1017
    %v1342 = vpack.c.b16 %v1022, %v1018
    %v1343 = vpack.c.b16 %v1023, %v1019
    %v1344 = vpack.c.b16 %v1024, %v1020
    %v1345 = vpack.c.b16 %v1029, %v1025
    %v1346 = vpack.c.b16 %v1030, %v1026
    %v1347 = vpack.c.b16 %v1031, %v1027
    %v1348 = vpack.c.b16 %v1032, %v1028
    %v1349 = vpack.c.b16 %v1037, %v1033
    %v1350 = vpack.c.b16 %v1038, %v1034
    %v1351 = vpack.c.b16 %v1039, %v1035
    %v1352 = vpack.c.b16 %v1040, %v1036
    %v1353 = vpack.c.b16 %v1045, %v1041
    %v1354 = vpack.c.b16 %v1046, %v1042
    %v1355 = vpack.c.b16 %v1047, %v1043
    %v1356 = vpack.c.b16 %v1048, %v1044
    %v1357 = vpack.c.b16 %v1053, %v1049
    %v1358 = vpack.c.b16 %v1054, %v1050
    %v1359 = vpack.c.b16 %v1055, %v1051
    %v1360 = vpack.c.b16 %v1056, %v1052
    %v1361 = vpack.c.b16 %v1061, %v1057
    %v1362 = vpack.c.b16 %v1062, %v1058
    %v1363 = vpack.c.b16 %v1063, %v1059
    %v1364 = vpack.c.b16 %v1064, %v1060
    %v1365 = vpack.c.b16 %v1069, %v1065
    %v1366 = vpack.c.b16 %v1070, %v1066
    %v1367 = vpack.c.b16 %v1071, %v1067
    %v1368 = vpack.c.b16 %v1072, %v1068
    %v1369 = vpack.c.b16 %v1077, %v1073
    %v1370 = vpack.c.b16 %v1078, %v1074
    %v1371 = vpack.c.b16 %v1079, %v1075
    %v1372 = vpack.c.b16 %v1080, %v1076
    %v1373 = vpack.c.b16 %v1085, %v1081
    %v1374 = vpack.c.b16 %v1086, %v1082
    %v1375 = vpack.c.b16 %v1087, %v1083
    %v1376 = vpack.c.b16 %v1088, %v1084
    %v1377 = vpack.c.b16 %v1093, %v1089
    %v1378 = vpack.c.b16 %v1094, %v1090
    %v1379 = vpack.c.b16 %v1095, %v1091
    %v1380 = vpack.c.b16 %v1096, %v1092
    %v1381 = vpack.c.b16 %v1101, %v1097
    %v1382 = vpack.c.b16 %v1102, %v1098
    %v1383 = vpack.c.b16 %v1103, %v1099
    %v1384 = vpack.c.b16 %v1104, %v1100
    %v1385 = vpack.c.b16 %v1109, %v1105
    %v1386 = vpack.c.b16 %v1110, %v1106
    %v1387 = vpack.c.b16 %v1111, %v1107
    %v1388 = vpack.c.b16 %v1112, %v1108
    %v1389 = vpack.c.b16 %v1117, %v1113
    %v1390 = vpack.c.b16 %v1118, %v1114
    %v1391 = vpack.c.b16 %v1119, %v1115
    %v1392 = vpack.c.b16 %v1120, %v1116
    %v1393 = vpack.c.b16 %v1125, %v1121
    %v1394 = vpack.c.b16 %v1126, %v1122
    %v1395 = vpack.c.b16 %v1127, %v1123
    %v1396 = vpack.c.b16 %v1128, %v1124
    %v1397 = vpack.c.b16 %v1133, %v1129
    %v1398 = vpack.c.b16 %v1134, %v1130
    %v1399 = vpack.c.b16 %v1135, %v1131
    %v1400 = vpack.c.b16 %v1136, %v1132
    %v1401 = vpack.c.b16 %v1141, %v1137
    %v1402 = vpack.c.b16 %v1142, %v1138
    %v1403 = vpack.c.b16 %v1143, %v1139
    %v1404 = vpack.c.b16 %v1144, %v1140
    %v1405 = vpack.c.b16 %v1149, %v1145
    %v1406 = vpack.c.b16 %v1150, %v1146
    %v1407 = vpack.c.b16 %v1151, %v1147
    %v1408 = vpack.c.b16 %v1152, %v1148
    %v1409 = vpack.c.b16 %v1157, %v1153
    %v1410 = vpack.c.b16 %v1158, %v1154
    %v1411 = vpack.c.b16 %v1159, %v1155
    %v1412 = vpack.c.b16 %v1160, %v1156
    %v1413 = vpack.c.b16 %v1165, %v1161
    %v1414 = vpack.c.b16 %v1166, %v1162
    %v1415 = vpack.c.b16 %v1167, %v1163
    %v1416 = vpack.c.b16 %v1168, %v1164
    %v1417 = vpack.c.b16 %v1173, %v1169
    %v1418 = vpack.c.b16 %v1174, %v1170
    %v1419 = vpack.c.b16 %v1175, %v1171
    %v1420 = vpack.c.b16 %v1176, %v1172
    %v1421 = vpack.c.b16 %v1181, %v1177
    %v1422 = vpack.c.b16 %v1182, %v1178
    %v1423 = vpack.c.b16 %v1183, %v1179
    %v1424 = vpack.c.b16 %v1184, %v1180
    %v1425 = vpack.c.b16 %v1189, %v1185
    %v1426 = vpack.c.b16 %v1190, %v1186
    %v1427 = vpack.c.b16 %v1191, %v1187
    %v1428 = vpack.c.b16 %v1192, %v1188
    %v1429 = vpack.c.b16 %v1197, %v1193
    %v1430 = vpack.c.b16 %v1198, %v1194
    %v1431 = vpack.c.b16 %v1199, %v1195
    %v1432 = vpack.c.b16 %v1200, %v1196
    %v1433 = vpack.c.b16 %v1205, %v1201
    %v1434 = vpack.c.b16 %v1206, %v1202
    %v1435 = vpack.c.b16 %v1207, %v1203
    %v1436 = vpack.c.b16 %v1208, %v1204
    %v1437 = vpack.c.b16 %v1213, %v1209
    %v1438 = vpack.c.b16 %v1214, %v1210
    %v1439 = vpack.c.b16 %v1215, %v1211
    %v1440 = vpack.c.b16 %v1216, %v1212
    %1665 = vmatprep.subr.bf16.mxu0 %v1246
    %1666 = vmatpush1.bf16.msra.mxu0 %v1245
    %1667 = vmatprep.subr.bf16.mxu0 %v1242
    %1668 = vmatpush1.bf16.msra.mxu0 %v1241
    %1669 = vmatprep.subr.bf16.mxu0 %v1238
    %1670 = vmatpush1.bf16.msra.mxu0 %v1237
    %1671 = vmatprep.subr.bf16.mxu0 %v1234
    %1672 = vmatpush1.bf16.msra.mxu0 %v1233
    %1673 = vmatprep.subr.bf16.mxu0 %v1230
    %1674 = vmatpush1.bf16.msra.mxu0 %v1229
    %1675 = vmatprep.subr.bf16.mxu0 %v1226
    %1676 = vmatpush1.bf16.msra.mxu0 %v1225
    %1677 = vmatprep.subr.bf16.mxu0 %v1222
    %1678 = vmatpush1.bf16.msra.mxu0 %v1221
    %1679 = vmatprep.subr.bf16.mxu0 %v1218
    %1680 = vmatpush1.bf16.msra.mxu0 %v1217
    %1681 = vmatprep.subr.bf16.mxu0 %v1278
    %1682 = vmatpush2.bf16.msra.mxu0 %v1277
    %1683 = vmatprep.subr.bf16.mxu0 %v1274
    %1684 = vmatpush2.bf16.msra.mxu0 %v1273
    %1685 = vmatprep.subr.bf16.mxu0 %v1270
    %1686 = vmatpush2.bf16.msra.mxu0 %v1269
    %1687 = vmatprep.subr.bf16.mxu0 %v1266
    %1688 = vmatpush2.bf16.msra.mxu0 %v1265
    %1689 = vmatprep.subr.bf16.mxu0 %v1262
    %1690 = vmatpush2.bf16.msra.mxu0 %v1261
    %1691 = vmatprep.subr.bf16.mxu0 %v1258
    %1692 = vmatpush2.bf16.msra.mxu0 %v1257
    %1693 = vmatprep.subr.bf16.mxu0 %v1254
    %1694 = vmatpush2.bf16.msra.mxu0 %v1253
    %1695 = vmatprep.subr.bf16.mxu0 %v1250
    %1696 = vmatpush2.bf16.msra.mxu0 %v1249
    %1697 = vmatprep.mubr.bf16.mxu0 %v532
    %1698 = vmatmul.mubr.bf16.gmra.mxu0 %v531
    %v1699 = vpop.f32.mrf.mxu0
    %v1700 = vadd.f32 %v492, %v1699
    %v1701 = vpop.f32.mrf.mxu0
    %v1702 = vadd.f32 %v496, %v1701
    %v1703 = vpop.f32.mrf.mxu0
    %v1704 = vadd.f32 %v492, %v1703
    %v1705 = vpop.f32.mrf.mxu0
    %v1706 = vadd.f32 %v496, %v1705
    %1707 = vdwg.mxu0
    %1708 = vmatprep.subr.bf16.mxu0 %v1310
    %1709 = vmatpush1.bf16.msra.mxu0 %v1309
    %1710 = vmatprep.subr.bf16.mxu0 %v1306
    %1711 = vmatpush1.bf16.msra.mxu0 %v1305
    %1712 = vmatprep.subr.bf16.mxu0 %v1302
    %1713 = vmatpush1.bf16.msra.mxu0 %v1301
    %1714 = vmatprep.subr.bf16.mxu0 %v1298
    %1715 = vmatpush1.bf16.msra.mxu0 %v1297
    %1716 = vmatprep.subr.bf16.mxu0 %v1294
    %1717 = vmatpush1.bf16.msra.mxu0 %v1293
    %1718 = vmatprep.subr.bf16.mxu0 %v1290
    %1719 = vmatpush1.bf16.msra.mxu0 %v1289
    %1720 = vmatprep.subr.bf16.mxu0 %v1286
    %1721 = vmatpush1.bf16.msra.mxu0 %v1285
    %1722 = vmatprep.subr.bf16.mxu0 %v1282
    %1723 = vmatpush1.bf16.msra.mxu0 %v1281
    %1724 = vmatprep.subr.bf16.mxu0 %v1342
    %1725 = vmatpush2.bf16.msra.mxu0 %v1341
    %1726 = vmatprep.subr.bf16.mxu0 %v1338
    %1727 = vmatpush2.bf16.msra.mxu0 %v1337
    %1728 = vmatprep.subr.bf16.mxu0 %v1334
    %1729 = vmatpush2.bf16.msra.mxu0 %v1333
    %1730 = vmatprep.subr.bf16.mxu0 %v1330
    %1731 = vmatpush2.bf16.msra.mxu0 %v1329
    %1732 = vmatprep.subr.bf16.mxu0 %v1326
    %1733 = vmatpush2.bf16.msra.mxu0 %v1325
    %1734 = vmatprep.subr.bf16.mxu0 %v1322
    %1735 = vmatpush2.bf16.msra.mxu0 %v1321
    %1736 = vmatprep.subr.bf16.mxu0 %v1318
    %1737 = vmatpush2.bf16.msra.mxu0 %v1317
    %1738 = vmatprep.subr.bf16.mxu0 %v1314
    %1739 = vmatpush2.bf16.msra.mxu0 %v1313
    %1740 = vmatprep.mubr.bf16.mxu0 %v534
    %1741 = vmatmul.mubr.bf16.gmra.mxu0 %v533
    %v1742 = vpop.f32.mrf.mxu0
    %v1743 = vadd.f32 %v1700, %v1742
    %v1744 = vpop.f32.mrf.mxu0
    %v1745 = vadd.f32 %v1702, %v1744
    %v1746 = vpop.f32.mrf.mxu0
    %v1747 = vadd.f32 %v1704, %v1746
    %v1748 = vpop.f32.mrf.mxu0
    %v1749 = vadd.f32 %v1706, %v1748
    %1750 = vdwg.mxu0
    %1751 = vmatprep.subr.bf16.mxu0 %v1374
    %1752 = vmatpush1.bf16.msra.mxu0 %v1373
    %1753 = vmatprep.subr.bf16.mxu0 %v1370
    %1754 = vmatpush1.bf16.msra.mxu0 %v1369
    %1755 = vmatprep.subr.bf16.mxu0 %v1366
    %1756 = vmatpush1.bf16.msra.mxu0 %v1365
    %1757 = vmatprep.subr.bf16.mxu0 %v1362
    %1758 = vmatpush1.bf16.msra.mxu0 %v1361
    %1759 = vmatprep.subr.bf16.mxu0 %v1358
    %1760 = vmatpush1.bf16.msra.mxu0 %v1357
    %1761 = vmatprep.subr.bf16.mxu0 %v1354
    %1762 = vmatpush1.bf16.msra.mxu0 %v1353
    %1763 = vmatprep.subr.bf16.mxu0 %v1350
    %1764 = vmatpush1.bf16.msra.mxu0 %v1349
    %1765 = vmatprep.subr.bf16.mxu0 %v1346
    %1766 = vmatpush1.bf16.msra.mxu0 %v1345
    %1767 = vmatprep.subr.bf16.mxu0 %v1406
    %1768 = vmatpush2.bf16.msra.mxu0 %v1405
    %1769 = vmatprep.subr.bf16.mxu0 %v1402
    %1770 = vmatpush2.bf16.msra.mxu0 %v1401
    %1771 = vmatprep.subr.bf16.mxu0 %v1398
    %1772 = vmatpush2.bf16.msra.mxu0 %v1397
    %1773 = vmatprep.subr.bf16.mxu0 %v1394
    %1774 = vmatpush2.bf16.msra.mxu0 %v1393
    %1775 = vmatprep.subr.bf16.mxu0 %v1390
    %1776 = vmatpush2.bf16.msra.mxu0 %v1389
    %1777 = vmatprep.subr.bf16.mxu0 %v1386
    %1778 = vmatpush2.bf16.msra.mxu0 %v1385
    %1779 = vmatprep.subr.bf16.mxu0 %v1382
    %1780 = vmatpush2.bf16.msra.mxu0 %v1381
    %1781 = vmatprep.subr.bf16.mxu0 %v1378
    %1782 = vmatpush2.bf16.msra.mxu0 %v1377
    %1783 = vmatprep.mubr.bf16.mxu0 %v536
    %1784 = vmatmul.mubr.bf16.gmra.mxu0 %v535
    %v1785 = vpop.f32.mrf.mxu0
    %v1786 = vadd.f32 %v1743, %v1785
    %v1787 = vpop.f32.mrf.mxu0
    %v1788 = vadd.f32 %v1745, %v1787
    %v1789 = vpop.f32.mrf.mxu0
    %v1790 = vadd.f32 %v1747, %v1789
    %v1791 = vpop.f32.mrf.mxu0
    %v1792 = vadd.f32 %v1749, %v1791
    %1793 = vdwg.mxu0
    %1794 = vmatprep.subr.bf16.mxu0 %v1438
    %1795 = vmatpush1.bf16.msra.mxu0 %v1437
    %1796 = vmatprep.subr.bf16.mxu0 %v1434
    %1797 = vmatpush1.bf16.msra.mxu0 %v1433
    %1798 = vmatprep.subr.bf16.mxu0 %v1430
    %1799 = vmatpush1.bf16.msra.mxu0 %v1429
    %1800 = vmatprep.subr.bf16.mxu0 %v1426
    %1801 = vmatpush1.bf16.msra.mxu0 %v1425
    %1802 = vmatprep.subr.bf16.mxu0 %v1422
    %1803 = vmatpush1.bf16.msra.mxu0 %v1421
    %1804 = vmatprep.subr.bf16.mxu0 %v1418
    %1805 = vmatpush1.bf16.msra.mxu0 %v1417
    %1806 = vmatprep.subr.bf16.mxu0 %v1414
    %1807 = vmatpush1.bf16.msra.mxu0 %v1413
    %1808 = vmatprep.subr.bf16.mxu0 %v1410
    %1809 = vmatpush1.bf16.msra.mxu0 %v1409
    %1810 = vmatprep.subr.bf16.mxu0 0
    %1811 = vmatpush2.bf16.msra.mxu0 0
    %1812 = vmatprep.subr.bf16.mxu0 0
    %1813 = vmatpush2.bf16.msra.mxu0 0
    %1814 = vmatprep.subr.bf16.mxu0 0
    %1815 = vmatpush2.bf16.msra.mxu0 0
    %1816 = vmatprep.subr.bf16.mxu0 0
    %1817 = vmatpush2.bf16.msra.mxu0 0
    %1818 = vmatprep.subr.bf16.mxu0 0
    %1819 = vmatpush2.bf16.msra.mxu0 0
    %1820 = vmatprep.subr.bf16.mxu0 0
    %1821 = vmatpush2.bf16.msra.mxu0 0
    %1822 = vmatprep.subr.bf16.mxu0 0
    %1823 = vmatpush2.bf16.msra.mxu0 0
    %1824 = vmatprep.subr.bf16.mxu0 0
    %1825 = vmatpush2.bf16.msra.mxu0 0
    %1826 = vmatprep.mubr.bf16.mxu0 0
    %1827 = vmatmul.mubr.bf16.gmra.mxu0 %v537
    %v1828 = vpop.f32.mrf.mxu0
    %v1829 = vadd.f32 %v1786, %v1828
    %v1830 = vpop.f32.mrf.mxu0
    %v1831 = vadd.f32 %v1788, %v1830
    %v1832 = vpop.f32.mrf.mxu0
    %v1833 = vadd.f32 %v1790, %v1832
    %v1834 = vpop.f32.mrf.mxu0
    %v1835 = vadd.f32 %v1792, %v1834
    %1836 = vdwg.mxu0
    %1837 = vmatprep.subr.bf16.mxu0 %v1248
    %1838 = vmatpush1.bf16.msra.mxu0 %v1247
    %1839 = vmatprep.subr.bf16.mxu0 %v1244
    %1840 = vmatpush1.bf16.msra.mxu0 %v1243
    %1841 = vmatprep.subr.bf16.mxu0 %v1240
    %1842 = vmatpush1.bf16.msra.mxu0 %v1239
    %1843 = vmatprep.subr.bf16.mxu0 %v1236
    %1844 = vmatpush1.bf16.msra.mxu0 %v1235
    %1845 = vmatprep.subr.bf16.mxu0 %v1232
    %1846 = vmatpush1.bf16.msra.mxu0 %v1231
    %1847 = vmatprep.subr.bf16.mxu0 %v1228
    %1848 = vmatpush1.bf16.msra.mxu0 %v1227
    %1849 = vmatprep.subr.bf16.mxu0 %v1224
    %1850 = vmatpush1.bf16.msra.mxu0 %v1223
    %1851 = vmatprep.subr.bf16.mxu0 %v1220
    %1852 = vmatpush1.bf16.msra.mxu0 %v1219
    %1853 = vmatprep.subr.bf16.mxu0 %v1280
    %1854 = vmatpush2.bf16.msra.mxu0 %v1279
    %1855 = vmatprep.subr.bf16.mxu0 %v1276
    %1856 = vmatpush2.bf16.msra.mxu0 %v1275
    %1857 = vmatprep.subr.bf16.mxu0 %v1272
    %1858 = vmatpush2.bf16.msra.mxu0 %v1271
    %1859 = vmatprep.subr.bf16.mxu0 %v1268
    %1860 = vmatpush2.bf16.msra.mxu0 %v1267
    %1861 = vmatprep.subr.bf16.mxu0 %v1264
    %1862 = vmatpush2.bf16.msra.mxu0 %v1263
    %1863 = vmatprep.subr.bf16.mxu0 %v1260
    %1864 = vmatpush2.bf16.msra.mxu0 %v1259
    %1865 = vmatprep.subr.bf16.mxu0 %v1256
    %1866 = vmatpush2.bf16.msra.mxu0 %v1255
    %1867 = vmatprep.subr.bf16.mxu0 %v1252
    %1868 = vmatpush2.bf16.msra.mxu0 %v1251
    %1869 = vmatprep.mubr.bf16.mxu0 %v532
    %1870 = vmatmul.mubr.bf16.gmra.mxu0 %v531
    %v1871 = vpop.f32.mrf.mxu0
    %v1872 = vadd.f32 %v500, %v1871
    %v1873 = vpop.f32.mrf.mxu0
    %v1874 = vadd.f32 %v504, %v1873
    %v1875 = vpop.f32.mrf.mxu0
    %v1876 = vadd.f32 %v500, %v1875
    %v1877 = vpop.f32.mrf.mxu0
    %v1878 = vadd.f32 %v504, %v1877
    %1879 = vdwg.mxu0
    %1880 = vmatprep.subr.bf16.mxu0 %v1312
    %1881 = vmatpush1.bf16.msra.mxu0 %v1311
    %1882 = vmatprep.subr.bf16.mxu0 %v1308
    %1883 = vmatpush1.bf16.msra.mxu0 %v1307
    %1884 = vmatprep.subr.bf16.mxu0 %v1304
    %1885 = vmatpush1.bf16.msra.mxu0 %v1303
    %1886 = vmatprep.subr.bf16.mxu0 %v1300
    %1887 = vmatpush1.bf16.msra.mxu0 %v1299
    %1888 = vmatprep.subr.bf16.mxu0 %v1296
    %1889 = vmatpush1.bf16.msra.mxu0 %v1295
    %1890 = vmatprep.subr.bf16.mxu0 %v1292
    %1891 = vmatpush1.bf16.msra.mxu0 %v1291
    %1892 = vmatprep.subr.bf16.mxu0 %v1288
    %1893 = vmatpush1.bf16.msra.mxu0 %v1287
    %1894 = vmatprep.subr.bf16.mxu0 %v1284
    %1895 = vmatpush1.bf16.msra.mxu0 %v1283
    %1896 = vmatprep.subr.bf16.mxu0 %v1344
    %1897 = vmatpush2.bf16.msra.mxu0 %v1343
    %1898 = vmatprep.subr.bf16.mxu0 %v1340
    %1899 = vmatpush2.bf16.msra.mxu0 %v1339
    %1900 = vmatprep.subr.bf16.mxu0 %v1336
    %1901 = vmatpush2.bf16.msra.mxu0 %v1335
    %1902 = vmatprep.subr.bf16.mxu0 %v1332
    %1903 = vmatpush2.bf16.msra.mxu0 %v1331
    %1904 = vmatprep.subr.bf16.mxu0 %v1328
    %1905 = vmatpush2.bf16.msra.mxu0 %v1327
    %1906 = vmatprep.subr.bf16.mxu0 %v1324
    %1907 = vmatpush2.bf16.msra.mxu0 %v1323
    %1908 = vmatprep.subr.bf16.mxu0 %v1320
    %1909 = vmatpush2.bf16.msra.mxu0 %v1319
    %1910 = vmatprep.subr.bf16.mxu0 %v1316
    %1911 = vmatpush2.bf16.msra.mxu0 %v1315
    %1912 = vmatprep.mubr.bf16.mxu0 %v534
    %1913 = vmatmul.mubr.bf16.gmra.mxu0 %v533
    %v1914 = vpop.f32.mrf.mxu0
    %v1915 = vadd.f32 %v1872, %v1914
    %v1916 = vpop.f32.mrf.mxu0
    %v1917 = vadd.f32 %v1874, %v1916
    %v1918 = vpop.f32.mrf.mxu0
    %v1919 = vadd.f32 %v1876, %v1918
    %v1920 = vpop.f32.mrf.mxu0
    %v1921 = vadd.f32 %v1878, %v1920
    %1922 = vdwg.mxu0
    %1923 = vmatprep.subr.bf16.mxu0 %v1376
    %1924 = vmatpush1.bf16.msra.mxu0 %v1375
    %1925 = vmatprep.subr.bf16.mxu0 %v1372
    %1926 = vmatpush1.bf16.msra.mxu0 %v1371
    %1927 = vmatprep.subr.bf16.mxu0 %v1368
    %1928 = vmatpush1.bf16.msra.mxu0 %v1367
    %1929 = vmatprep.subr.bf16.mxu0 %v1364
    %1930 = vmatpush1.bf16.msra.mxu0 %v1363
    %1931 = vmatprep.subr.bf16.mxu0 %v1360
    %1932 = vmatpush1.bf16.msra.mxu0 %v1359
    %1933 = vmatprep.subr.bf16.mxu0 %v1356
    %1934 = vmatpush1.bf16.msra.mxu0 %v1355
    %1935 = vmatprep.subr.bf16.mxu0 %v1352
    %1936 = vmatpush1.bf16.msra.mxu0 %v1351
    %1937 = vmatprep.subr.bf16.mxu0 %v1348
    %1938 = vmatpush1.bf16.msra.mxu0 %v1347
    %1939 = vmatprep.subr.bf16.mxu0 %v1408
    %1940 = vmatpush2.bf16.msra.mxu0 %v1407
    %1941 = vmatprep.subr.bf16.mxu0 %v1404
    %1942 = vmatpush2.bf16.msra.mxu0 %v1403
    %1943 = vmatprep.subr.bf16.mxu0 %v1400
    %1944 = vmatpush2.bf16.msra.mxu0 %v1399
    %1945 = vmatprep.subr.bf16.mxu0 %v1396
    %1946 = vmatpush2.bf16.msra.mxu0 %v1395
    %1947 = vmatprep.subr.bf16.mxu0 %v1392
    %1948 = vmatpush2.bf16.msra.mxu0 %v1391
    %1949 = vmatprep.subr.bf16.mxu0 %v1388
    %1950 = vmatpush2.bf16.msra.mxu0 %v1387
    %1951 = vmatprep.subr.bf16.mxu0 %v1384
    %1952 = vmatpush2.bf16.msra.mxu0 %v1383
    %1953 = vmatprep.subr.bf16.mxu0 %v1380
    %1954 = vmatpush2.bf16.msra.mxu0 %v1379
    %1955 = vmatprep.mubr.bf16.mxu0 %v536
    %1956 = vmatmul.mubr.bf16.gmra.mxu0 %v535
    %v1957 = vpop.f32.mrf.mxu0
    %v1958 = vadd.f32 %v1915, %v1957
    %v1959 = vpop.f32.mrf.mxu0
    %v1960 = vadd.f32 %v1917, %v1959
    %v1961 = vpop.f32.mrf.mxu0
    %v1962 = vadd.f32 %v1919, %v1961
    %v1963 = vpop.f32.mrf.mxu0
    %v1964 = vadd.f32 %v1921, %v1963
    %1965 = vdwg.mxu0
    %1966 = vmatprep.subr.bf16.mxu0 %v1440
    %1967 = vmatpush1.bf16.msra.mxu0 %v1439
    %1968 = vmatprep.subr.bf16.mxu0 %v1436
    %1969 = vmatpush1.bf16.msra.mxu0 %v1435
    %1970 = vmatprep.subr.bf16.mxu0 %v1432
    %1971 = vmatpush1.bf16.msra.mxu0 %v1431
    %1972 = vmatprep.subr.bf16.mxu0 %v1428
    %1973 = vmatpush1.bf16.msra.mxu0 %v1427
    %1974 = vmatprep.subr.bf16.mxu0 %v1424
    %1975 = vmatpush1.bf16.msra.mxu0 %v1423
    %1976 = vmatprep.subr.bf16.mxu0 %v1420
    %1977 = vmatpush1.bf16.msra.mxu0 %v1419
    %1978 = vmatprep.subr.bf16.mxu0 %v1416
    %1979 = vmatpush1.bf16.msra.mxu0 %v1415
    %1980 = vmatprep.subr.bf16.mxu0 %v1412
    %1981 = vmatpush1.bf16.msra.mxu0 %v1411
    %1982 = vmatprep.subr.bf16.mxu0 0
    %1983 = vmatpush2.bf16.msra.mxu0 0
    %1984 = vmatprep.subr.bf16.mxu0 0
    %1985 = vmatpush2.bf16.msra.mxu0 0
    %1986 = vmatprep.subr.bf16.mxu0 0
    %1987 = vmatpush2.bf16.msra.mxu0 0
    %1988 = vmatprep.subr.bf16.mxu0 0
    %1989 = vmatpush2.bf16.msra.mxu0 0
    %1990 = vmatprep.subr.bf16.mxu0 0
    %1991 = vmatpush2.bf16.msra.mxu0 0
    %1992 = vmatprep.subr.bf16.mxu0 0
    %1993 = vmatpush2.bf16.msra.mxu0 0
    %1994 = vmatprep.subr.bf16.mxu0 0
    %1995 = vmatpush2.bf16.msra.mxu0 0
    %1996 = vmatprep.subr.bf16.mxu0 0
    %1997 = vmatpush2.bf16.msra.mxu0 0
    %1998 = vmatprep.mubr.bf16.mxu0 0
    %1999 = vmatmul.mubr.bf16.gmra.mxu0 %v537
    %v2000 = vpop.f32.mrf.mxu0
    %v2001 = vadd.f32 %v1958, %v2000
    %v2002 = vpop.f32.mrf.mxu0
    %v2003 = vadd.f32 %v1960, %v2002
    %v2004 = vpop.f32.mrf.mxu0
    %v2005 = vadd.f32 %v1962, %v2004
    %v2006 = vpop.f32.mrf.mxu0
    %v2007 = vadd.f32 %v1964, %v2006
    %2008 = vdwg.mxu0
    %v2009 = vmax.f32 %v1829, 0.0
    %v2010 = vmax.f32 %v1831, 0.0
    %v2011 = vmax.f32 %v2001, 0.0
    %v2012 = vmax.f32 %v2003, 0.0
    %v2013 = vmax.f32 %v1833, 0.0
    %v2014 = vmax.f32 %v1835, 0.0
    %v2015 = vmax.f32 %v2005, 0.0
    %v2016 = vmax.f32 %v2007, 0.0
    %v2017 = vpack.c.bf16 %v2013, %v2009
    %v2018 = vpack.c.bf16 %v2014, %v2010
    %v2019 = vpack.c.bf16 %v2015, %v2011
    %v2020 = vpack.c.bf16 %v2016, %v2012
    %v2021 = vld [vmem:[#allocation9] sm:$0xff]
    %v2022 = vld [vmem:[#allocation9 + $0x8] sm:$0xff]
    %v2023 = vld [vmem:[#allocation9 + $0x10] sm:$0xff]
    %v2024 = vld [vmem:[#allocation9 + $0x18] sm:$0xff]
    %v2025 = vld [vmem:[#allocation9 + $0x20] sm:$0xff]
    %v2026 = vld [vmem:[#allocation9 + $0x28] sm:$0xff]
    %v2027 = vld [vmem:[#allocation9 + $0x30] sm:$0xff]
    %v2028 = vld [vmem:[#allocation9 + $0x38] sm:$0xff]
    %v2029 = vld [vmem:[#allocation9 + $0x40] sm:$0xff]
    %v2030 = vld [vmem:[#allocation9 + $0x48] sm:$0xff]
    %v2031 = vld [vmem:[#allocation9 + $0x50] sm:$0xff]
    %v2032 = vld [vmem:[#allocation9 + $0x58] sm:$0xff]
    %v2033 = vld [vmem:[#allocation9 + $0x60] sm:$0xff]
    %v2034 = vld [vmem:[#allocation9 + $0x68] sm:$0xff]
    %v2035 = vld [vmem:[#allocation9 + $0x70] sm:$0xff]
    %v2036 = vld [vmem:[#allocation9 + $0x78] sm:$0xff]
    %v2037 = vld [vmem:[#allocation9 + $0x80] sm:$0xff]
    %v2038 = vld [vmem:[#allocation9 + $0x88] sm:$0xff]
    %v2039 = vld [vmem:[#allocation9 + $0x90] sm:$0xff]
    %v2040 = vld [vmem:[#allocation9 + $0x98] sm:$0xff]
    %v2041 = vld [vmem:[#allocation9 + $0xa0] sm:$0xff]
    %v2042 = vld [vmem:[#allocation9 + $0xa8] sm:$0xff]
    %v2043 = vld [vmem:[#allocation9 + $0xb0] sm:$0xff]
    %v2044 = vld [vmem:[#allocation9 + $0xb8] sm:$0xff]
    %v2045 = vld [vmem:[#allocation9 + $0xc0] sm:$0xff]
    %v2046 = vld [vmem:[#allocation9 + $0xc8] sm:$0xff]
    %v2047 = vld [vmem:[#allocation9 + $0xd0] sm:$0xff]
    %v2048 = vld [vmem:[#allocation9 + $0xd8] sm:$0xff]
    %v2049 = vld [vmem:[#allocation9 + $0xe0] sm:$0xff]
    %v2050 = vld [vmem:[#allocation9 + $0xe8] sm:$0xff]
    %v2051 = vld [vmem:[#allocation9 + $0xf0] sm:$0xff]
    %v2052 = vld [vmem:[#allocation9 + $0xf8] sm:$0xff]
    %v2053 = vld [vmem:[#allocation9 + $0x100] sm:$0xff]
    %v2054 = vld [vmem:[#allocation9 + $0x108] sm:$0xff]
    %v2055 = vld [vmem:[#allocation9 + $0x110] sm:$0xff]
    %v2056 = vld [vmem:[#allocation9 + $0x118] sm:$0xff]
    %v2057 = vld [vmem:[#allocation9 + $0x120] sm:$0xff]
    %v2058 = vld [vmem:[#allocation9 + $0x128] sm:$0xff]
    %v2059 = vld [vmem:[#allocation9 + $0x130] sm:$0xff]
    %v2060 = vld [vmem:[#allocation9 + $0x138] sm:$0xff]
    %v2061 = vld [vmem:[#allocation9 + $0x140] sm:$0xff]
    %v2062 = vld [vmem:[#allocation9 + $0x148] sm:$0xff]
    %v2063 = vld [vmem:[#allocation9 + $0x150] sm:$0xff]
    %v2064 = vld [vmem:[#allocation9 + $0x158] sm:$0xff]
    %v2065 = vld [vmem:[#allocation9 + $0x160] sm:$0xff]
    %v2066 = vld [vmem:[#allocation9 + $0x168] sm:$0xff]
    %v2067 = vld [vmem:[#allocation9 + $0x170] sm:$0xff]
    %v2068 = vld [vmem:[#allocation9 + $0x178] sm:$0xff]
    %v2069 = vld [vmem:[#allocation9 + $0x180] sm:$0xff]
    %v2070 = vld [vmem:[#allocation9 + $0x188] sm:$0xff]
    %v2071 = vld [vmem:[#allocation9 + $0x190] sm:$0xff]
    %v2072 = vld [vmem:[#allocation9 + $0x198] sm:$0xff]
    %v2073 = vld [vmem:[#allocation9 + $0x1a0] sm:$0xff]
    %v2074 = vld [vmem:[#allocation9 + $0x1a8] sm:$0xff]
    %v2075 = vld [vmem:[#allocation9 + $0x1b0] sm:$0xff]
    %v2076 = vld [vmem:[#allocation9 + $0x1b8] sm:$0xff]
    %v2077 = vld [vmem:[#allocation9 + $0x1c0] sm:$0xff]
    %v2078 = vld [vmem:[#allocation9 + $0x1c8] sm:$0xff]
    %v2079 = vld [vmem:[#allocation9 + $0x1d0] sm:$0xff]
    %v2080 = vld [vmem:[#allocation9 + $0x1d8] sm:$0xff]
    %v2081 = vld [vmem:[#allocation9 + $0x1e0] sm:$0xff]
    %v2082 = vld [vmem:[#allocation9 + $0x1e8] sm:$0xff]
    %v2083 = vld [vmem:[#allocation9 + $0x1f0] sm:$0xff]
    %v2084 = vld [vmem:[#allocation9 + $0x1f8] sm:$0xff]
    %v2085 = vld [vmem:[%s5 + $0x4] sm:$0x3]
    %v2087 = vlaneseq
    %v2088 = vshrl.u32 %v2087, 7
    %v2089 = vsub.s32 0, %v2088
    %v2090 = vrot.slane %v2085, %v2089
    %v2091 = vlaneseq
    %v2092 = vshrl.u32 %v2091, 7
    %v2093 = vsub.s32 1, %v2092
    %v2094 = vrot.slane %v2085, %v2093
    %v2161 = vunpack.c.l.b16 %v2021
    %v2162 = vunpack.c.h.b16 %v2021
    %v2163 = vunpack.c.l.b16 %v2022
    %v2164 = vunpack.c.h.b16 %v2022
    %v2165 = vunpack.c.l.b16 %v2023
    %v2166 = vunpack.c.h.b16 %v2023
    %v2167 = vunpack.c.l.b16 %v2024
    %v2168 = vunpack.c.h.b16 %v2024
    %v2169 = vunpack.c.l.b16 %v2025
    %v2170 = vunpack.c.h.b16 %v2025
    %v2171 = vunpack.c.l.b16 %v2026
    %v2172 = vunpack.c.h.b16 %v2026
    %v2173 = vunpack.c.l.b16 %v2027
    %v2174 = vunpack.c.h.b16 %v2027
    %v2175 = vunpack.c.l.b16 %v2028
    %v2176 = vunpack.c.h.b16 %v2028
    %v2177 = vunpack.c.l.b16 %v2029
    %v2178 = vunpack.c.h.b16 %v2029
    %v2179 = vunpack.c.l.b16 %v2030
    %v2180 = vunpack.c.h.b16 %v2030
    %v2181 = vunpack.c.l.b16 %v2031
    %v2182 = vunpack.c.h.b16 %v2031
    %v2183 = vunpack.c.l.b16 %v2032
    %v2184 = vunpack.c.h.b16 %v2032
    %v2185 = vunpack.c.l.b16 %v2033
    %v2186 = vunpack.c.h.b16 %v2033
    %v2187 = vunpack.c.l.b16 %v2034
    %v2188 = vunpack.c.h.b16 %v2034
    %v2189 = vunpack.c.l.b16 %v2035
    %v2190 = vunpack.c.h.b16 %v2035
    %v2191 = vunpack.c.l.b16 %v2036
    %v2192 = vunpack.c.h.b16 %v2036
    %v2193 = vunpack.c.l.b16 %v2037
    %v2194 = vunpack.c.h.b16 %v2037
    %v2195 = vunpack.c.l.b16 %v2038
    %v2196 = vunpack.c.h.b16 %v2038
    %v2197 = vunpack.c.l.b16 %v2039
    %v2198 = vunpack.c.h.b16 %v2039
    %v2199 = vunpack.c.l.b16 %v2040
    %v2200 = vunpack.c.h.b16 %v2040
    %v2201 = vunpack.c.l.b16 %v2041
    %v2202 = vunpack.c.h.b16 %v2041
    %v2203 = vunpack.c.l.b16 %v2042
    %v2204 = vunpack.c.h.b16 %v2042
    %v2205 = vunpack.c.l.b16 %v2043
    %v2206 = vunpack.c.h.b16 %v2043
    %v2207 = vunpack.c.l.b16 %v2044
    %v2208 = vunpack.c.h.b16 %v2044
    %v2209 = vunpack.c.l.b16 %v2045
    %v2210 = vunpack.c.h.b16 %v2045
    %v2211 = vunpack.c.l.b16 %v2046
    %v2212 = vunpack.c.h.b16 %v2046
    %v2213 = vunpack.c.l.b16 %v2047
    %v2214 = vunpack.c.h.b16 %v2047
    %v2215 = vunpack.c.l.b16 %v2048
    %v2216 = vunpack.c.h.b16 %v2048
    %v2217 = vunpack.c.l.b16 %v2049
    %v2218 = vunpack.c.h.b16 %v2049
    %v2219 = vunpack.c.l.b16 %v2050
    %v2220 = vunpack.c.h.b16 %v2050
    %v2221 = vunpack.c.l.b16 %v2051
    %v2222 = vunpack.c.h.b16 %v2051
    %v2223 = vunpack.c.l.b16 %v2052
    %v2224 = vunpack.c.h.b16 %v2052
    %v2225 = vunpack.c.l.b16 %v2053
    %v2226 = vunpack.c.h.b16 %v2053
    %v2227 = vunpack.c.l.b16 %v2054
    %v2228 = vunpack.c.h.b16 %v2054
    %v2229 = vunpack.c.l.b16 %v2055
    %v2230 = vunpack.c.h.b16 %v2055
    %v2231 = vunpack.c.l.b16 %v2056
    %v2232 = vunpack.c.h.b16 %v2056
    %v2233 = vunpack.c.l.b16 %v2057
    %v2234 = vunpack.c.h.b16 %v2057
    %v2235 = vunpack.c.l.b16 %v2058
    %v2236 = vunpack.c.h.b16 %v2058
    %v2237 = vunpack.c.l.b16 %v2059
    %v2238 = vunpack.c.h.b16 %v2059
    %v2239 = vunpack.c.l.b16 %v2060
    %v2240 = vunpack.c.h.b16 %v2060
    %v2241 = vunpack.c.l.b16 %v2061
    %v2242 = vunpack.c.h.b16 %v2061
    %v2243 = vunpack.c.l.b16 %v2062
    %v2244 = vunpack.c.h.b16 %v2062
    %v2245 = vunpack.c.l.b16 %v2063
    %v2246 = vunpack.c.h.b16 %v2063
    %v2247 = vunpack.c.l.b16 %v2064
    %v2248 = vunpack.c.h.b16 %v2064
    %v2249 = vunpack.c.l.b16 %v2065
    %v2250 = vunpack.c.h.b16 %v2065
    %v2251 = vunpack.c.l.b16 %v2066
    %v2252 = vunpack.c.h.b16 %v2066
    %v2253 = vunpack.c.l.b16 %v2067
    %v2254 = vunpack.c.h.b16 %v2067
    %v2255 = vunpack.c.l.b16 %v2068
    %v2256 = vunpack.c.h.b16 %v2068
    %v2257 = vunpack.c.l.b16 %v2069
    %v2258 = vunpack.c.h.b16 %v2069
    %v2259 = vunpack.c.l.b16 %v2070
    %v2260 = vunpack.c.h.b16 %v2070
    %v2261 = vunpack.c.l.b16 %v2071
    %v2262 = vunpack.c.h.b16 %v2071
    %v2263 = vunpack.c.l.b16 %v2072
    %v2264 = vunpack.c.h.b16 %v2072
    %v2265 = vunpack.c.l.b16 %v2073
    %v2266 = vunpack.c.h.b16 %v2073
    %v2267 = vunpack.c.l.b16 %v2074
    %v2268 = vunpack.c.h.b16 %v2074
    %v2269 = vunpack.c.l.b16 %v2075
    %v2270 = vunpack.c.h.b16 %v2075
    %v2271 = vunpack.c.l.b16 %v2076
    %v2272 = vunpack.c.h.b16 %v2076
    %v2273 = vunpack.c.l.b16 %v2077
    %v2274 = vunpack.c.h.b16 %v2077
    %v2275 = vunpack.c.l.b16 %v2078
    %v2276 = vunpack.c.h.b16 %v2078
    %v2277 = vunpack.c.l.b16 %v2079
    %v2278 = vunpack.c.h.b16 %v2079
    %v2279 = vunpack.c.l.b16 %v2080
    %v2280 = vunpack.c.h.b16 %v2080
    %v2281 = vunpack.c.l.b16 %v2081
    %v2282 = vunpack.c.h.b16 %v2081
    %v2283 = vunpack.c.l.b16 %v2082
    %v2284 = vunpack.c.h.b16 %v2082
    %v2285 = vunpack.c.l.b16 %v2083
    %v2286 = vunpack.c.h.b16 %v2083
    %v2287 = vunpack.c.l.b16 %v2084
    %v2288 = vunpack.c.h.b16 %v2084
    %v2289 = vpack.c.b16 %v2163, %v2161
    %v2290 = vpack.c.b16 %v2164, %v2162
    %v2291 = vpack.c.b16 %v2167, %v2165
    %v2292 = vpack.c.b16 %v2168, %v2166
    %v2293 = vpack.c.b16 %v2171, %v2169
    %v2294 = vpack.c.b16 %v2172, %v2170
    %v2295 = vpack.c.b16 %v2175, %v2173
    %v2296 = vpack.c.b16 %v2176, %v2174
    %v2297 = vpack.c.b16 %v2179, %v2177
    %v2298 = vpack.c.b16 %v2180, %v2178
    %v2299 = vpack.c.b16 %v2183, %v2181
    %v2300 = vpack.c.b16 %v2184, %v2182
    %v2301 = vpack.c.b16 %v2187, %v2185
    %v2302 = vpack.c.b16 %v2188, %v2186
    %v2303 = vpack.c.b16 %v2191, %v2189
    %v2304 = vpack.c.b16 %v2192, %v2190
    %v2305 = vpack.c.b16 %v2195, %v2193
    %v2306 = vpack.c.b16 %v2196, %v2194
    %v2307 = vpack.c.b16 %v2199, %v2197
    %v2308 = vpack.c.b16 %v2200, %v2198
    %v2309 = vpack.c.b16 %v2203, %v2201
    %v2310 = vpack.c.b16 %v2204, %v2202
    %v2311 = vpack.c.b16 %v2207, %v2205
    %v2312 = vpack.c.b16 %v2208, %v2206
    %v2313 = vpack.c.b16 %v2211, %v2209
    %v2314 = vpack.c.b16 %v2212, %v2210
    %v2315 = vpack.c.b16 %v2215, %v2213
    %v2316 = vpack.c.b16 %v2216, %v2214
    %v2317 = vpack.c.b16 %v2219, %v2217
    %v2318 = vpack.c.b16 %v2220, %v2218
    %v2319 = vpack.c.b16 %v2223, %v2221
    %v2320 = vpack.c.b16 %v2224, %v2222
    %v2321 = vpack.c.b16 %v2227, %v2225
    %v2322 = vpack.c.b16 %v2228, %v2226
    %v2323 = vpack.c.b16 %v2231, %v2229
    %v2324 = vpack.c.b16 %v2232, %v2230
    %v2325 = vpack.c.b16 %v2235, %v2233
    %v2326 = vpack.c.b16 %v2236, %v2234
    %v2327 = vpack.c.b16 %v2239, %v2237
    %v2328 = vpack.c.b16 %v2240, %v2238
    %v2329 = vpack.c.b16 %v2243, %v2241
    %v2330 = vpack.c.b16 %v2244, %v2242
    %v2331 = vpack.c.b16 %v2247, %v2245
    %v2332 = vpack.c.b16 %v2248, %v2246
    %v2333 = vpack.c.b16 %v2251, %v2249
    %v2334 = vpack.c.b16 %v2252, %v2250
    %v2335 = vpack.c.b16 %v2255, %v2253
    %v2336 = vpack.c.b16 %v2256, %v2254
    %v2337 = vpack.c.b16 %v2259, %v2257
    %v2338 = vpack.c.b16 %v2260, %v2258
    %v2339 = vpack.c.b16 %v2263, %v2261
    %v2340 = vpack.c.b16 %v2264, %v2262
    %v2341 = vpack.c.b16 %v2267, %v2265
    %v2342 = vpack.c.b16 %v2268, %v2266
    %v2343 = vpack.c.b16 %v2271, %v2269
    %v2344 = vpack.c.b16 %v2272, %v2270
    %v2345 = vpack.c.b16 %v2275, %v2273
    %v2346 = vpack.c.b16 %v2276, %v2274
    %v2347 = vpack.c.b16 %v2279, %v2277
    %v2348 = vpack.c.b16 %v2280, %v2278
    %v2349 = vpack.c.b16 %v2283, %v2281
    %v2350 = vpack.c.b16 %v2284, %v2282
    %v2351 = vpack.c.b16 %v2287, %v2285
    %v2352 = vpack.c.b16 %v2288, %v2286
    %2417 = vmatprep.subr.bf16.mxu0 %v2304
    %2418 = vmatpush1.bf16.msra.mxu0 %v2303
    %2419 = vmatprep.subr.bf16.mxu0 %v2302
    %2420 = vmatpush1.bf16.msra.mxu0 %v2301
    %2421 = vmatprep.subr.bf16.mxu0 %v2300
    %2422 = vmatpush1.bf16.msra.mxu0 %v2299
    %2423 = vmatprep.subr.bf16.mxu0 %v2298
    %2424 = vmatpush1.bf16.msra.mxu0 %v2297
    %2425 = vmatprep.subr.bf16.mxu0 %v2296
    %2426 = vmatpush1.bf16.msra.mxu0 %v2295
    %2427 = vmatprep.subr.bf16.mxu0 %v2294
    %2428 = vmatpush1.bf16.msra.mxu0 %v2293
    %2429 = vmatprep.subr.bf16.mxu0 %v2292
    %2430 = vmatpush1.bf16.msra.mxu0 %v2291
    %2431 = vmatprep.subr.bf16.mxu0 %v2290
    %2432 = vmatpush1.bf16.msra.mxu0 %v2289
    %2433 = vmatprep.subr.bf16.mxu0 %v2320
    %2434 = vmatpush2.bf16.msra.mxu0 %v2319
    %2435 = vmatprep.subr.bf16.mxu0 %v2318
    %2436 = vmatpush2.bf16.msra.mxu0 %v2317
    %2437 = vmatprep.subr.bf16.mxu0 %v2316
    %2438 = vmatpush2.bf16.msra.mxu0 %v2315
    %2439 = vmatprep.subr.bf16.mxu0 %v2314
    %2440 = vmatpush2.bf16.msra.mxu0 %v2313
    %2441 = vmatprep.subr.bf16.mxu0 %v2312
    %2442 = vmatpush2.bf16.msra.mxu0 %v2311
    %2443 = vmatprep.subr.bf16.mxu0 %v2310
    %2444 = vmatpush2.bf16.msra.mxu0 %v2309
    %2445 = vmatprep.subr.bf16.mxu0 %v2308
    %2446 = vmatpush2.bf16.msra.mxu0 %v2307
    %2447 = vmatprep.subr.bf16.mxu0 %v2306
    %2448 = vmatpush2.bf16.msra.mxu0 %v2305
    %2449 = vmatprep.mubr.bf16.mxu0 %v2018
    %2450 = vmatmul.mubr.bf16.gmra.mxu0 %v2017
    %v2451 = vpop.f32.mrf.mxu0
    %v2452 = vadd.f32 %v2090, %v2451
    %v2453 = vpop.f32.mrf.mxu0
    %v2454 = vadd.f32 %v2094, %v2453
    %v2455 = vpop.f32.mrf.mxu0
    %v2456 = vadd.f32 %v2090, %v2455
    %v2457 = vpop.f32.mrf.mxu0
    %v2458 = vadd.f32 %v2094, %v2457
    %2459 = vdwg.mxu0
    %2460 = vmatprep.subr.bf16.mxu0 %v2336
    %2461 = vmatpush1.bf16.msra.mxu0 %v2335
    %2462 = vmatprep.subr.bf16.mxu0 %v2334
    %2463 = vmatpush1.bf16.msra.mxu0 %v2333
    %2464 = vmatprep.subr.bf16.mxu0 %v2332
    %2465 = vmatpush1.bf16.msra.mxu0 %v2331
    %2466 = vmatprep.subr.bf16.mxu0 %v2330
    %2467 = vmatpush1.bf16.msra.mxu0 %v2329
    %2468 = vmatprep.subr.bf16.mxu0 %v2328
    %2469 = vmatpush1.bf16.msra.mxu0 %v2327
    %2470 = vmatprep.subr.bf16.mxu0 %v2326
    %2471 = vmatpush1.bf16.msra.mxu0 %v2325
    %2472 = vmatprep.subr.bf16.mxu0 %v2324
    %2473 = vmatpush1.bf16.msra.mxu0 %v2323
    %2474 = vmatprep.subr.bf16.mxu0 %v2322
    %2475 = vmatpush1.bf16.msra.mxu0 %v2321
    %2476 = vmatprep.subr.bf16.mxu0 %v2352
    %2477 = vmatpush2.bf16.msra.mxu0 %v2351
    %2478 = vmatprep.subr.bf16.mxu0 %v2350
    %2479 = vmatpush2.bf16.msra.mxu0 %v2349
    %2480 = vmatprep.subr.bf16.mxu0 %v2348
    %2481 = vmatpush2.bf16.msra.mxu0 %v2347
    %2482 = vmatprep.subr.bf16.mxu0 %v2346
    %2483 = vmatpush2.bf16.msra.mxu0 %v2345
    %2484 = vmatprep.subr.bf16.mxu0 %v2344
    %2485 = vmatpush2.bf16.msra.mxu0 %v2343
    %2486 = vmatprep.subr.bf16.mxu0 %v2342
    %2487 = vmatpush2.bf16.msra.mxu0 %v2341
    %2488 = vmatprep.subr.bf16.mxu0 %v2340
    %2489 = vmatpush2.bf16.msra.mxu0 %v2339
    %2490 = vmatprep.subr.bf16.mxu0 %v2338
    %2491 = vmatpush2.bf16.msra.mxu0 %v2337
    %2492 = vmatprep.mubr.bf16.mxu0 %v2020
    %2493 = vmatmul.mubr.bf16.gmra.mxu0 %v2019
    %v2494 = vpop.f32.mrf.mxu0
    %v2495 = vadd.f32 %v2452, %v2494
    %v2496 = vpop.f32.mrf.mxu0
    %v2497 = vadd.f32 %v2454, %v2496
    %v2498 = vpop.f32.mrf.mxu0
    %v2499 = vadd.f32 %v2456, %v2498
    %v2500 = vpop.f32.mrf.mxu0
    %v2501 = vadd.f32 %v2458, %v2500
    %2502 = vdwg.mxu0
    %v2503 = vmax.f32 %v2495, 0.0
    %v2504 = vmax.f32 %v2497, 0.0
    %v2505 = vmax.f32 %v2499, 0.0
    %v2506 = vmax.f32 %v2501, 0.0
    %v2507 = vpack.c.bf16 %v2505, %v2503
    %v2508 = vpack.c.bf16 %v2506, %v2504
    %v2509 = vld [vmem:[%s2] sm:$0xf]
    %v2510 = vld [vmem:[%s2 + $0x4] sm:$0xf]
    %v2511 = vld [vmem:[%s2 + $0x8] sm:$0xf]
    %v2512 = vld [vmem:[%s2 + $0xc] sm:$0xf]
    %v2513 = vld [vmem:[%s2 + $0x10] sm:$0xf]
    %v2514 = vld [vmem:[%s2 + $0x14] sm:$0xf]
    %v2515 = vld [vmem:[%s2 + $0x18] sm:$0xf]
    %v2516 = vld [vmem:[%s2 + $0x1c] sm:$0xf]
    %v2517 = vld [vmem:[%s2 + $0x20] sm:$0xf]
    %v2518 = vld [vmem:[%s2 + $0x24] sm:$0xf]
    %v2519 = vld [vmem:[%s2 + $0x28] sm:$0xf]
    %v2520 = vld [vmem:[%s2 + $0x2c] sm:$0xf]
    %v2521 = vld [vmem:[%s2 + $0x30] sm:$0xf]
    %v2522 = vld [vmem:[%s2 + $0x34] sm:$0xf]
    %v2523 = vld [vmem:[%s2 + $0x38] sm:$0xf]
    %v2524 = vld [vmem:[%s2 + $0x3c] sm:$0xf]
    %v2525 = vld [vmem:[%s2 + $0x40] sm:$0xf]
    %v2526 = vld [vmem:[%s2 + $0x44] sm:$0xf]
    %v2527 = vld [vmem:[%s2 + $0x48] sm:$0xf]
    %v2528 = vld [vmem:[%s2 + $0x4c] sm:$0xf]
    %v2529 = vld [vmem:[%s2 + $0x50] sm:$0xf]
    %v2530 = vld [vmem:[%s2 + $0x54] sm:$0xf]
    %v2531 = vld [vmem:[%s2 + $0x58] sm:$0xf]
    %v2532 = vld [vmem:[%s2 + $0x5c] sm:$0xf]
    %v2533 = vld [vmem:[%s2 + $0x60] sm:$0xf]
    %v2534 = vld [vmem:[%s2 + $0x64] sm:$0xf]
    %v2535 = vld [vmem:[%s2 + $0x68] sm:$0xf]
    %v2536 = vld [vmem:[%s2 + $0x6c] sm:$0xf]
    %v2537 = vld [vmem:[%s2 + $0x70] sm:$0xf]
    %v2538 = vld [vmem:[%s2 + $0x74] sm:$0xf]
    %v2539 = vld [vmem:[%s2 + $0x78] sm:$0xf]
    %v2540 = vld [vmem:[%s2 + $0x7c] sm:$0xf]
    %v2541 = vld [vmem:[%s5 + $0x6] sm:$0x1]
    %v2543 = vlaneseq
    %v2544 = vshrl.u32 %v2543, 7
    %v2545 = vsub.s32 0, %v2544
    %v2546 = vrot.slane %v2541, %v2545
    %v2580 = vunpack.c.l.b16 %v2509
    %v2581 = vunpack.c.l.b16 %v2510
    %v2582 = vunpack.c.l.b16 %v2511
    %v2583 = vunpack.c.l.b16 %v2512
    %v2584 = vunpack.c.l.b16 %v2513
    %v2585 = vunpack.c.l.b16 %v2514
    %v2586 = vunpack.c.l.b16 %v2515
    %v2587 = vunpack.c.l.b16 %v2516
    %v2588 = vunpack.c.l.b16 %v2517
    %v2589 = vunpack.c.l.b16 %v2518
    %v2590 = vunpack.c.l.b16 %v2519
    %v2591 = vunpack.c.l.b16 %v2520
    %v2592 = vunpack.c.l.b16 %v2521
    %v2593 = vunpack.c.l.b16 %v2522
    %v2594 = vunpack.c.l.b16 %v2523
    %v2595 = vunpack.c.l.b16 %v2524
    %v2596 = vunpack.c.l.b16 %v2525
    %v2597 = vunpack.c.l.b16 %v2526
    %v2598 = vunpack.c.l.b16 %v2527
    %v2599 = vunpack.c.l.b16 %v2528
    %v2600 = vunpack.c.l.b16 %v2529
    %v2601 = vunpack.c.l.b16 %v2530
    %v2602 = vunpack.c.l.b16 %v2531
    %v2603 = vunpack.c.l.b16 %v2532
    %v2604 = vunpack.c.l.b16 %v2533
    %v2605 = vunpack.c.l.b16 %v2534
    %v2606 = vunpack.c.l.b16 %v2535
    %v2607 = vunpack.c.l.b16 %v2536
    %v2608 = vunpack.c.l.b16 %v2537
    %v2609 = vunpack.c.l.b16 %v2538
    %v2610 = vunpack.c.l.b16 %v2539
    %v2611 = vunpack.c.l.b16 %v2540
    %v2612 = vpack.c.b16 %v2581, %v2580
    %v2613 = vpack.c.b16 %v2583, %v2582
    %v2614 = vpack.c.b16 %v2585, %v2584
    %v2615 = vpack.c.b16 %v2587, %v2586
    %v2616 = vpack.c.b16 %v2589, %v2588
    %v2617 = vpack.c.b16 %v2591, %v2590
    %v2618 = vpack.c.b16 %v2593, %v2592
    %v2619 = vpack.c.b16 %v2595, %v2594
    %v2620 = vpack.c.b16 %v2597, %v2596
    %v2621 = vpack.c.b16 %v2599, %v2598
    %v2622 = vpack.c.b16 %v2601, %v2600
    %v2623 = vpack.c.b16 %v2603, %v2602
    %v2624 = vpack.c.b16 %v2605, %v2604
    %v2625 = vpack.c.b16 %v2607, %v2606
    %v2626 = vpack.c.b16 %v2609, %v2608
    %v2627 = vpack.c.b16 %v2611, %v2610
    %2644 = vmatprep.subr.bf16.mxu0 0
    %2645 = vmatpush1.bf16.msra.mxu0 %v2619
    %2646 = vmatprep.subr.bf16.mxu0 0
    %2647 = vmatpush1.bf16.msra.mxu0 %v2618
    %2648 = vmatprep.subr.bf16.mxu0 0
    %2649 = vmatpush1.bf16.msra.mxu0 %v2617
    %2650 = vmatprep.subr.bf16.mxu0 0
    %2651 = vmatpush1.bf16.msra.mxu0 %v2616
    %2652 = vmatprep.subr.bf16.mxu0 0
    %2653 = vmatpush1.bf16.msra.mxu0 %v2615
    %2654 = vmatprep.subr.bf16.mxu0 0
    %2655 = vmatpush1.bf16.msra.mxu0 %v2614
    %2656 = vmatprep.subr.bf16.mxu0 0
    %2657 = vmatpush1.bf16.msra.mxu0 %v2613
    %2658 = vmatprep.subr.bf16.mxu0 0
    %2659 = vmatpush1.bf16.msra.mxu0 %v2612
    %2660 = vmatprep.subr.bf16.mxu0 0
    %2661 = vmatpush2.bf16.msra.mxu0 %v2627
    %2662 = vmatprep.subr.bf16.mxu0 0
    %2663 = vmatpush2.bf16.msra.mxu0 %v2626
    %2664 = vmatprep.subr.bf16.mxu0 0
    %2665 = vmatpush2.bf16.msra.mxu0 %v2625
    %2666 = vmatprep.subr.bf16.mxu0 0
    %2667 = vmatpush2.bf16.msra.mxu0 %v2624
    %2668 = vmatprep.subr.bf16.mxu0 0
    %2669 = vmatpush2.bf16.msra.mxu0 %v2623
    %2670 = vmatprep.subr.bf16.mxu0 0
    %2671 = vmatpush2.bf16.msra.mxu0 %v2622
    %2672 = vmatprep.subr.bf16.mxu0 0
    %2673 = vmatpush2.bf16.msra.mxu0 %v2621
    %2674 = vmatprep.subr.bf16.mxu0 0
    %2675 = vmatpush2.bf16.msra.mxu0 %v2620
    %2676 = vmatprep.mubr.bf16.mxu0 %v2508
    %2677 = vmatmul.mubr.bf16.gmra.mxu0 %v2507
    %v2678 = vpop.f32.mrf.mxu0
    %v2679 = vadd.f32 %v2546, %v2678
    %v2680 = vpop.f32.mrf.mxu0
    %v2681 = vpop.f32.mrf.mxu0
    %v2682 = vadd.f32 %v2546, %v2681
    %v2683 = vpop.f32.mrf.mxu0
    %2684 = vdwg.mxu0
    %v2685 = vmax.f32 %v2679, 0.0
    %v2686 = vmax.f32 %v2682, 0.0
    %v2687 = vpack.c.bf16 %v2686, %v2685
    %v2688 = vld [vmem:[%s3] sm:$0xf]
    %v2689 = vld [vmem:[%s3 + $0x4] sm:$0xf]
    %v2690 = vld [vmem:[%s3 + $0x8] sm:$0xf]
    %v2691 = vld [vmem:[%s3 + $0xc] sm:$0xf]
    %v2692 = vld [vmem:[%s3 + $0x10] sm:$0xf]
    %v2693 = vld [vmem:[%s3 + $0x14] sm:$0xf]
    %v2694 = vld [vmem:[%s3 + $0x18] sm:$0xf]
    %v2695 = vld [vmem:[%s3 + $0x1c] sm:$0xf]
    %v2696 = vld [vmem:[%s3 + $0x20] sm:$0xf]
    %v2697 = vld [vmem:[%s3 + $0x24] sm:$0xf]
    %v2698 = vld [vmem:[%s3 + $0x28] sm:$0xf]
    %v2699 = vld [vmem:[%s3 + $0x2c] sm:$0xf]
    %v2700 = vld [vmem:[%s3 + $0x30] sm:$0xf]
    %v2701 = vld [vmem:[%s3 + $0x34] sm:$0xf]
    %v2702 = vld [vmem:[%s3 + $0x38] sm:$0xf]
    %v2703 = vld [vmem:[%s3 + $0x3c] sm:$0xf]
    %v2704 = vld [vmem:[%s5 + $0x7] sm:$0x1]
    %v2706 = vlaneseq
    %v2707 = vshrl.u32 %v2706, 7
    %v2708 = vsub.s32 0, %v2707
    %v2709 = vrot.slane %v2704, %v2708
    %v2727 = vunpack.c.l.b16 %v2688
    %v2728 = vunpack.c.l.b16 %v2689
    %v2729 = vunpack.c.l.b16 %v2690
    %v2730 = vunpack.c.l.b16 %v2691
    %v2731 = vunpack.c.l.b16 %v2692
    %v2732 = vunpack.c.l.b16 %v2693
    %v2733 = vunpack.c.l.b16 %v2694
    %v2734 = vunpack.c.l.b16 %v2695
    %v2735 = vunpack.c.l.b16 %v2696
    %v2736 = vunpack.c.l.b16 %v2697
    %v2737 = vunpack.c.l.b16 %v2698
    %v2738 = vunpack.c.l.b16 %v2699
    %v2739 = vunpack.c.l.b16 %v2700
    %v2740 = vunpack.c.l.b16 %v2701
    %v2741 = vunpack.c.l.b16 %v2702
    %v2742 = vunpack.c.l.b16 %v2703
    %v2743 = vpack.c.b16 %v2728, %v2727
    %v2744 = vpack.c.b16 %v2730, %v2729
    %v2745 = vpack.c.b16 %v2732, %v2731
    %v2746 = vpack.c.b16 %v2734, %v2733
    %v2747 = vpack.c.b16 %v2736, %v2735
    %v2748 = vpack.c.b16 %v2738, %v2737
    %v2749 = vpack.c.b16 %v2740, %v2739
    %v2750 = vpack.c.b16 %v2742, %v2741
    %2759 = vmatprep.subr.bf16.mxu0 0
    %2760 = vmatpush1.bf16.msra.mxu0 %v2750
    %2761 = vmatprep.subr.bf16.mxu0 0
    %2762 = vmatpush1.bf16.msra.mxu0 %v2749
    %2763 = vmatprep.subr.bf16.mxu0 0
    %2764 = vmatpush1.bf16.msra.mxu0 %v2748
    %2765 = vmatprep.subr.bf16.mxu0 0
    %2766 = vmatpush1.bf16.msra.mxu0 %v2747
    %2767 = vmatprep.subr.bf16.mxu0 0
    %2768 = vmatpush1.bf16.msra.mxu0 %v2746
    %2769 = vmatprep.subr.bf16.mxu0 0
    %2770 = vmatpush1.bf16.msra.mxu0 %v2745
    %2771 = vmatprep.subr.bf16.mxu0 0
    %2772 = vmatpush1.bf16.msra.mxu0 %v2744
    %2773 = vmatprep.subr.bf16.mxu0 0
    %2774 = vmatpush1.bf16.msra.mxu0 %v2743
    %2775 = vmatprep.subr.bf16.mxu0 0
    %2776 = vmatpush2.bf16.msra.mxu0 0
    %2777 = vmatprep.subr.bf16.mxu0 0
    %2778 = vmatpush2.bf16.msra.mxu0 0
    %2779 = vmatprep.subr.bf16.mxu0 0
    %2780 = vmatpush2.bf16.msra.mxu0 0
    %2781 = vmatprep.subr.bf16.mxu0 0
    %2782 = vmatpush2.bf16.msra.mxu0 0
    %2783 = vmatprep.subr.bf16.mxu0 0
    %2784 = vmatpush2.bf16.msra.mxu0 0
    %2785 = vmatprep.subr.bf16.mxu0 0
    %2786 = vmatpush2.bf16.msra.mxu0 0
    %2787 = vmatprep.subr.bf16.mxu0 0
    %2788 = vmatpush2.bf16.msra.mxu0 0
    %2789 = vmatprep.subr.bf16.mxu0 0
    %2790 = vmatpush2.bf16.msra.mxu0 0
    %2791 = vmatprep.mubr.bf16.mxu0 0
    %2792 = vmatmul.mubr.bf16.gmra.mxu0 %v2687
    %v2793 = vpop.f32.mrf.mxu0
    %v2794 = vadd.f32 %v2709, %v2793
    %v2795 = vpop.f32.mrf.mxu0
    %v2796 = vpop.f32.mrf.mxu0
    %v2797 = vadd.f32 %v2709, %v2796
    %v2798 = vpop.f32.mrf.mxu0
    %2799 = vdwg.mxu0
    %v2800 = vmax.f32 %v2794, 0.0
    %v2801 = vmax.f32 %v2797, 0.0
    %v2802 = vpack.c.bf16 %v2801, %v2800
    %v2803 = vld [vmem:[%s4] sm:$0xf]
    %v2804 = vld [vmem:[%s4 + $0x4] sm:$0xf]
    %v2805 = vld [vmem:[%s4 + $0x8] sm:$0xf]
    %v2806 = vld [vmem:[%s4 + $0xc] sm:$0xf]
    %v2807 = vld [vmem:[%s4 + $0x10] sm:$0xf]
    %v2808 = vld [vmem:[%s4 + $0x14] sm:$0xf]
    %v2809 = vld [vmem:[%s4 + $0x18] sm:$0xf]
    %v2810 = vld [vmem:[%s4 + $0x1c] sm:$0xf]
    %v2811 = vld [vmem:[%s4 + $0x20] sm:$0xf]
    %v2812 = vld [vmem:[%s4 + $0x24] sm:$0xf]
    %v2813 = vld [vmem:[%s4 + $0x28] sm:$0xf]
    %v2814 = vld [vmem:[%s4 + $0x2c] sm:$0xf]
    %v2815 = vld [vmem:[%s4 + $0x30] sm:$0xf]
    %v2816 = vld [vmem:[%s4 + $0x34] sm:$0xf]
    %v2817 = vld [vmem:[%s4 + $0x38] sm:$0xf]
    %v2818 = vld [vmem:[%s4 + $0x3c] sm:$0xf]
    %v2819 = vld [vmem:[%s5 + $0x8] sm:$0x1]
    %v2821 = vlaneseq
    %v2822 = vshrl.u32 %v2821, 7
    %v2823 = vsub.s32 0, %v2822
    %v2824 = vrot.slane %v2819, %v2823
    %v2842 = vunpack.c.l.b16 %v2803
    %v2843 = vunpack.c.l.b16 %v2804
    %v2844 = vunpack.c.l.b16 %v2805
    %v2845 = vunpack.c.l.b16 %v2806
    %v2846 = vunpack.c.l.b16 %v2807
    %v2847 = vunpack.c.l.b16 %v2808
    %v2848 = vunpack.c.l.b16 %v2809
    %v2849 = vunpack.c.l.b16 %v2810
    %v2850 = vunpack.c.l.b16 %v2811
    %v2851 = vunpack.c.l.b16 %v2812
    %v2852 = vunpack.c.l.b16 %v2813
    %v2853 = vunpack.c.l.b16 %v2814
    %v2854 = vunpack.c.l.b16 %v2815
    %v2855 = vunpack.c.l.b16 %v2816
    %v2856 = vunpack.c.l.b16 %v2817
    %v2857 = vunpack.c.l.b16 %v2818
    %v2858 = vpack.c.b16 %v2843, %v2842
    %v2859 = vpack.c.b16 %v2845, %v2844
    %v2860 = vpack.c.b16 %v2847, %v2846
    %v2861 = vpack.c.b16 %v2849, %v2848
    %v2862 = vpack.c.b16 %v2851, %v2850
    %v2863 = vpack.c.b16 %v2853, %v2852
    %v2864 = vpack.c.b16 %v2855, %v2854
    %v2865 = vpack.c.b16 %v2857, %v2856
    %2874 = vmatprep.subr.bf16.mxu0 0
    %2875 = vmatpush1.bf16.msra.mxu0 %v2865
    %2876 = vmatprep.subr.bf16.mxu0 0
    %2877 = vmatpush1.bf16.msra.mxu0 %v2864
    %2878 = vmatprep.subr.bf16.mxu0 0
    %2879 = vmatpush1.bf16.msra.mxu0 %v2863
    %2880 = vmatprep.subr.bf16.mxu0 0
    %2881 = vmatpush1.bf16.msra.mxu0 %v2862
    %2882 = vmatprep.subr.bf16.mxu0 0
    %2883 = vmatpush1.bf16.msra.mxu0 %v2861
    %2884 = vmatprep.subr.bf16.mxu0 0
    %2885 = vmatpush1.bf16.msra.mxu0 %v2860
    %2886 = vmatprep.subr.bf16.mxu0 0
    %2887 = vmatpush1.bf16.msra.mxu0 %v2859
    %2888 = vmatprep.subr.bf16.mxu0 0
    %2889 = vmatpush1.bf16.msra.mxu0 %v2858
    %2890 = vmatprep.subr.bf16.mxu0 0
    %2891 = vmatpush2.bf16.msra.mxu0 0
    %2892 = vmatprep.subr.bf16.mxu0 0
    %2893 = vmatpush2.bf16.msra.mxu0 0
    %2894 = vmatprep.subr.bf16.mxu0 0
    %2895 = vmatpush2.bf16.msra.mxu0 0
    %2896 = vmatprep.subr.bf16.mxu0 0
    %2897 = vmatpush2.bf16.msra.mxu0 0
    %2898 = vmatprep.subr.bf16.mxu0 0
    %2899 = vmatpush2.bf16.msra.mxu0 0
    %2900 = vmatprep.subr.bf16.mxu0 0
    %2901 = vmatpush2.bf16.msra.mxu0 0
    %2902 = vmatprep.subr.bf16.mxu0 0
    %2903 = vmatpush2.bf16.msra.mxu0 0
    %2904 = vmatprep.subr.bf16.mxu0 0
    %2905 = vmatpush2.bf16.msra.mxu0 0
    %2906 = vmatprep.mubr.bf16.mxu0 0
    %2907 = vmatmul.mubr.bf16.gmra.mxu0 %v2802
    %v2908 = vpop.f32.mrf.mxu0
    %v2909 = vadd.f32 %v2824, %v2908
    %v2910 = vpop.f32.mrf.mxu0
    %v2911 = vpop.f32.mrf.mxu0
    %v2912 = vadd.f32 %v2824, %v2911
    %v2913 = vpop.f32.mrf.mxu0
    %2914 = vdwg.mxu0
    %v2915 = vpack.c.bf16 %v2912, %v2909
    %v2917 = vunpack.c.l.b16 %v2915
    %v2918 = vunpack.c.h.b16 %v2915
    %v2919 = vpack.c.b16 %v2917, %v2917
    %v2920 = vpack.c.b16 %v2918, %v2918
    %2923 = vst [vmem:[%s8] sm:$0xf] %v2919
    %2924 = vst [vmem:[%s8 + $0x4] sm:$0xf] %v2920
    // Predicated region
    $region38: #{net_forward.2} parent=1 // pred_check
      _
    $region39: #{net_forward.2} parent=1 // pred_check_branch
      %2926 = sbr.rel (0) target = $region41
    $region40: #{net_forward.2} parent=1 // pred_region
      _
    $region41: #{net_forward.2} parent=1 // pred_fallthru
      _
    // Predicated region
    $region42: #{net_forward.2} parent=1 // pred_check
      _
    $region43: #{net_forward.2} parent=1 // pred_check_branch
      %2928 = sbr.rel (0) target = $region45
    $region44: #{net_forward.2} parent=1 // pred_region
      _
    $region45: #{net_forward.2} parent=1 // pred_fallthru
      _
    %2929 = vsyncpa [#allocation8], 1
    %2930 = vsyncpa [#allocation10], 1

</llo_original>
